<compile_context>
chip_gen: v7x
topology: tpu7x:2x2x1
jax: 0.10.0
libtpu: 0.0.40
codegen_flags: <defaults>
</compile_context>

<pallas_src>
import math
from functools import partial

import jax
import jax.numpy as jnp
from jax import lax
from jax.experimental import pallas as pl
from jax.experimental.pallas import tpu as pltpu


def _layer_norm_f32(x, gamma, beta, eps):
    """PyTorch-style LayerNorm: gamma * (x - mean) / (unbiased_std + eps) + beta."""
    d = x.shape[-1]
    mean = jnp.mean(x, axis=-1, keepdims=True)
    xc = x - mean
    var = jnp.sum(xc * xc, axis=-1, keepdims=True) / (d - 1)
    inv = pl.reciprocal(jnp.sqrt(var) + eps, approx=True)   # EUP slot instead of VPU divide
    return (xc * inv) * gamma + beta


def encoder_layer_kernel(
    x_ref, ln1g_ref, ln1b_ref,
    wqkv_ref, bqkv_ref, wo_ref, bo_ref,
    ln2g_ref, ln2b_ref, w1_ref, b1_ref, w2_ref, b2_ref,
    o_ref,
    ctx_scr,
    *, num_heads, d_k, eps):
    D = num_heads * d_k

    x = x_ref[0].astype(jnp.float32)                                 # (S, D)

    # ---- LayerNorm 1 ----
    ln1 = _layer_norm_f32(x, ln1g_ref[...], ln1b_ref[...], eps)
    ln1_bf = ln1.astype(jnp.bfloat16)

    # ---- fused QKV projection: one full-width (S, D) @ (D, 3D) MXU matmul ----
    # (1/sqrt(d_k) is pre-folded into the Q columns of wqkv / bqkv on the host.)
    qkv = jnp.dot(ln1_bf, wqkv_ref[...],
                  preferred_element_type=jnp.float32) + bqkv_ref[...]  # (S, 3D) f32

    # ---- per-head attention; heads are static column slices of the resident qkv ----
    for h in range(num_heads):
        lo, hi = h * d_k, (h + 1) * d_k
        q = qkv[:, lo:hi]
        k = qkv[:, D + lo:D + hi]
        v = qkv[:, 2 * D + lo:2 * D + hi]

        scores = lax.dot_general(                                    # (S, S) = q @ k^T on the MXU
            q.astype(jnp.bfloat16), k.astype(jnp.bfloat16),
            (((1,), (1,)), ((), ())),
            preferred_element_type=jnp.float32)

        m = jnp.max(scores, axis=-1, keepdims=True)                  # f32 softmax
        e = jnp.exp(scores - m)
        inv = pl.reciprocal(jnp.sum(e, axis=-1, keepdims=True), approx=True)
        ctx = jnp.dot(e.astype(jnp.bfloat16), v.astype(jnp.bfloat16),
                      preferred_element_type=jnp.float32) * inv      # (S, d_k)

        ctx_scr[:, lo:hi] = ctx.astype(jnp.bfloat16)                 # concat heads in VMEM

    # ---- one long-K output projection + residual ----
    attn = jnp.dot(ctx_scr[...], wo_ref[...],
                   preferred_element_type=jnp.float32) + bo_ref[...]
    y = x + attn

    # ---- LayerNorm 2 + FFN + residual ----
    ln2 = _layer_norm_f32(y, ln2g_ref[...], ln2b_ref[...], eps)
    hid = jnp.dot(ln2.astype(jnp.bfloat16), w1_ref[...],
                  preferred_element_type=jnp.float32) + b1_ref[...]
    hid = jnp.maximum(hid, 0.0)                                      # ReLU (f32)
    ffn = jnp.dot(hid.astype(jnp.bfloat16), w2_ref[...],
                  preferred_element_type=jnp.float32) + b2_ref[...]
    o_ref[0] = (y + ffn).astype(o_ref.dtype)                         # lane-dense (S, D) store


def _pick_vmem_limit_bytes():
    """~3/4 of physical VMEM, capped at 100 MiB (96 MiB on v5e/v6e, 48 MiB on v7x)."""
    try:
        cap = pltpu.get_tpu_info().vmem_capacity_bytes
    except Exception:
        cap = 128 * 1024 * 1024
    return int(min(cap * 3 // 4, 100 * 1024 * 1024))


def encoder_layer(x, params, *, heads, eps=1e-6):
    """x: (B, S, D) f32.  params: f32 weights (D_in, D_out), biases (1, D_out), LN (1, D)."""
    B, S, D = x.shape
    assert D % heads == 0
    d_k = D // heads
    d_ff = params["w1"].shape[1]
    bf16, f32 = jnp.bfloat16, jnp.float32

    # host-side layout plumbing: fused QKV weights (scale folded into Q), bf16 MXU weights
    scale = 1.0 / math.sqrt(d_k)
    wqkv = jnp.concatenate([params["wq"] * scale, params["wk"], params["wv"]],
                           axis=1).astype(bf16)                      # (D, 3D)
    bqkv = jnp.concatenate([params["bq"] * scale, params["bk"], params["bv"]],
                           axis=1).astype(f32)                       # (1, 3D)
    wo, bo = params["wo"].astype(bf16), params["bo"].astype(f32)
    w1, b1 = params["w1"].astype(bf16), params["b1"].astype(f32)
    w2, b2 = params["w2"].astype(bf16), params["b2"].astype(f32)
    ln1g, ln1b = params["ln1_g"].astype(f32), params["ln1_b"].astype(f32)
    ln2g, ln2b = params["ln2_g"].astype(f32), params["ln2_b"].astype(f32)

    # Activation blocks walk the batch axis; every weight uses a constant index map so it is
    # fetched into VMEM once and stays resident for the whole grid.
    act_spec = pl.BlockSpec((1, S, D), lambda b: (b, 0, 0))
    vecD_spec = pl.BlockSpec((1, D), lambda b: (0, 0))
    wqkv_spec = pl.BlockSpec((D, 3 * D), lambda b: (0, 0))
    bqkv_spec = pl.BlockSpec((1, 3 * D), lambda b: (0, 0))
    wo_spec = pl.BlockSpec((D, D), lambda b: (0, 0))
    w1_spec = pl.BlockSpec((D, d_ff), lambda b: (0, 0))
    b1_spec = pl.BlockSpec((1, d_ff), lambda b: (0, 0))
    w2_spec = pl.BlockSpec((d_ff, D), lambda b: (0, 0))

    return pl.pallas_call(
        partial(encoder_layer_kernel, num_heads=heads, d_k=d_k, eps=eps),
        out_shape=jax.ShapeDtypeStruct((B, S, D), x.dtype),
        grid_spec=pltpu.PrefetchScalarGridSpec(
            num_scalar_prefetch=0,
            grid=(B,),
            in_specs=[act_spec,
                      vecD_spec, vecD_spec,          # ln1 gamma/beta
                      wqkv_spec, bqkv_spec,          # fused QKV
                      wo_spec, vecD_spec,            # output projection
                      vecD_spec, vecD_spec,          # ln2 gamma/beta
                      w1_spec, b1_spec,              # FFN layer 1
                      w2_spec, vecD_spec],           # FFN layer 2
            out_specs=act_spec,
            scratch_shapes=[pltpu.VMEM((S, D), jnp.bfloat16)],   # concatenated per-head contexts
        ),
        compiler_params=pltpu.CompilerParams(
            dimension_semantics=("parallel",),
            vmem_limit_bytes=_pick_vmem_limit_bytes(),
        ),
    )(x, ln1g, ln1b, wqkv, bqkv, wo, bo, ln2g, ln2b, w1, b1, w2, b2)


def reference_encoder_layer(x, params, *, heads, eps=1e-6):
    """Pure-JAX f32 reference mirroring the PyTorch EncoderLayer (eval mode, mask=None)."""
    B, S, D = x.shape
    d_k = D // heads

    def layer_norm(z, g, b):
        mean = z.mean(-1, keepdims=True)
        std = jnp.sqrt(jnp.sum((z - mean) ** 2, axis=-1, keepdims=True) / (D - 1))
        return g * (z - mean) / (std + eps) + b

    def linear(z, w, b):
        return z @ w + b

    def mha(q, k, v):
        def split(z):
            return z.reshape(B, S, heads, d_k).transpose(0, 2, 1, 3)
        Q = split(linear(q, params["wq"], params["bq"]))
        K = split(linear(k, params["wk"], params["bk"]))
        V = split(linear(v, params["wv"], params["bv"]))
        scores = jnp.einsum("bhqd,bhkd->bhqk", Q, K) / math.sqrt(d_k)
        p = jax.nn.softmax(scores, axis=-1)
        ctx = jnp.einsum("bhqk,bhkd->bhqd", p, V)
        ctx = ctx.transpose(0, 2, 1, 3).reshape(B, S, D)
        return linear(ctx, params["wo"], params["bo"])

    n1 = layer_norm(x, params["ln1_g"], params["ln1_b"])
    y = x + mha(n1, n1, n1)
    n2 = layer_norm(y, params["ln2_g"], params["ln2_b"])
    ffn = linear(jnp.maximum(linear(n2, params["w1"], params["b1"]), 0.0),
                 params["w2"], params["b2"])
    return y + ffn


if __name__ == "__main__":
    B, S, D, H = 2, 16, 128, 4      # d_k = 32
    D_FF = 256

    key = jax.random.PRNGKey(0)
    ks = jax.random.split(key, 20)

    def lin_init(kw, kb, fan_in, fan_out):
        bound = 1.0 / math.sqrt(fan_in)
        w = jax.random.uniform(kw, (fan_in, fan_out), jnp.float32, -bound, bound)
        b = jax.random.uniform(kb, (1, fan_out), jnp.float32, -bound, bound)
        return w, b

    wq, bq = lin_init(ks[0], ks[1], D, D)
    wk, bk = lin_init(ks[2], ks[3], D, D)
    wv, bv = lin_init(ks[4], ks[5], D, D)
    wo, bo = lin_init(ks[6], ks[7], D, D)
    w1, b1 = lin_init(ks[8], ks[9], D, D_FF)
    w2, b2 = lin_init(ks[10], ks[11], D_FF, D)

    params = {
        "wq": wq, "bq": bq, "wk": wk, "bk": bk, "wv": wv, "bv": bv,
        "wo": wo, "bo": bo, "w1": w1, "b1": b1, "w2": w2, "b2": b2,
        # LayerNorm affine params (perturbed from ones/zeros to exercise them).
        "ln1_g": 1.0 + 0.1 * jax.random.normal(ks[12], (1, D), jnp.float32),
        "ln1_b": 0.1 * jax.random.normal(ks[13], (1, D), jnp.float32),
        "ln2_g": 1.0 + 0.1 * jax.random.normal(ks[14], (1, D), jnp.float32),
        "ln2_b": 0.1 * jax.random.normal(ks[15], (1, D), jnp.float32),
    }

    x = jax.random.normal(ks[16], (B, S, D), jnp.float32)

    out = encoder_layer(x, params, heads=H)
    out = jax.block_until_ready(out)

    ref = reference_encoder_layer(x, params, heads=H)
    max_err = float(jnp.max(jnp.abs(out - ref)))
    assert out.shape == (B, S, D)
    # bf16 MXU operands (f32 accumulation) + approx reciprocals vs the pure-f32 reference.
    assert jnp.allclose(out, ref, atol=2e-2, rtol=2e-2), f"max abs err = {max_err}"

    print("KERNEL_OK")
</pallas_src>

<mosaic_0001>
module attributes {stable_mosaic.version = 11 : i64} {
  func.func @encoder_layer_kernel(%arg0: i32, %arg1: memref<1x16x128xf32, #tpu.memory_space<vmem>>, %arg2: memref<1x128xf32, #tpu.memory_space<vmem>>, %arg3: memref<1x128xf32, #tpu.memory_space<vmem>>, %arg4: memref<128x384xbf16, #tpu.memory_space<vmem>>, %arg5: memref<1x384xf32, #tpu.memory_space<vmem>>, %arg6: memref<128x128xbf16, #tpu.memory_space<vmem>>, %arg7: memref<1x128xf32, #tpu.memory_space<vmem>>, %arg8: memref<1x128xf32, #tpu.memory_space<vmem>>, %arg9: memref<1x128xf32, #tpu.memory_space<vmem>>, %arg10: memref<128x256xbf16, #tpu.memory_space<vmem>>, %arg11: memref<1x256xf32, #tpu.memory_space<vmem>>, %arg12: memref<256x128xbf16, #tpu.memory_space<vmem>>, %arg13: memref<1x128xf32, #tpu.memory_space<vmem>>, %arg14: memref<1x16x128xf32, #tpu.memory_space<vmem>>, %arg15: memref<16x128xbf16, #tpu.memory_space<vmem>>) attributes {dimension_semantics = [#tpu.dimension_semantics<parallel>], iteration_bounds = array<i64: 2>, scalar_prefetch = 0 : i64, scratch_operands = 1 : i64, tpu.core_type = #tpu.core_type<tc>, window_params = [{transform_indices = @transform_0, window_bounds = array<i64: 1, 16, 128>}, {pipeline_mode = #tpu.pipeline_mode<synchronous>, transform_indices = @transform_1, window_bounds = array<i64: 1, 128>}, {pipeline_mode = #tpu.pipeline_mode<synchronous>, transform_indices = @transform_2, window_bounds = array<i64: 1, 128>}, {pipeline_mode = #tpu.pipeline_mode<synchronous>, transform_indices = @transform_3, window_bounds = array<i64: 128, 384>}, {pipeline_mode = #tpu.pipeline_mode<synchronous>, transform_indices = @transform_4, window_bounds = array<i64: 1, 384>}, {pipeline_mode = #tpu.pipeline_mode<synchronous>, transform_indices = @transform_5, window_bounds = array<i64: 128, 128>}, {pipeline_mode = #tpu.pipeline_mode<synchronous>, transform_indices = @transform_6, window_bounds = array<i64: 1, 128>}, {pipeline_mode = #tpu.pipeline_mode<synchronous>, transform_indices = @transform_7, window_bounds = array<i64: 1, 128>}, {pipeline_mode = #tpu.pipeline_mode<synchronous>, transform_indices = @transform_8, window_bounds = array<i64: 1, 128>}, {pipeline_mode = #tpu.pipeline_mode<synchronous>, transform_indices = @transform_9, window_bounds = array<i64: 128, 256>}, {pipeline_mode = #tpu.pipeline_mode<synchronous>, transform_indices = @transform_10, window_bounds = array<i64: 1, 256>}, {pipeline_mode = #tpu.pipeline_mode<synchronous>, transform_indices = @transform_11, window_bounds = array<i64: 256, 128>}, {pipeline_mode = #tpu.pipeline_mode<synchronous>, transform_indices = @transform_12, window_bounds = array<i64: 1, 128>}, {transform_indices = @transform_13, window_bounds = array<i64: 1, 16, 128>}]} {
    %c0 = arith.constant 0 : index
    %c0_0 = arith.constant 0 : index
    %c0_1 = arith.constant 0 : index
    %0 = vector.load %arg1[%c0, %c0_0, %c0_1] : memref<1x16x128xf32, #tpu.memory_space<vmem>>, vector<1x16x128xf32>
    %1 = vector.shape_cast %0 : vector<1x16x128xf32> to vector<16x128xf32>
    %c0_2 = arith.constant 0 : index
    %c0_3 = arith.constant 0 : index
    %2 = vector.load %arg2[%c0_2, %c0_3] : memref<1x128xf32, #tpu.memory_space<vmem>>, vector<1x128xf32>
    %c0_4 = arith.constant 0 : index
    %c0_5 = arith.constant 0 : index
    %3 = vector.load %arg3[%c0_4, %c0_5] : memref<1x128xf32, #tpu.memory_space<vmem>>, vector<1x128xf32>
    %cst = arith.constant dense<0.000000e+00> : vector<16xf32>
    %4 = vector.multi_reduction <add>, %1, %cst [1] : vector<16x128xf32> to vector<16xf32>
    %5 = vector.shape_cast %4 : vector<16xf32> to vector<16x1xf32>
    %cst_6 = arith.constant 1.280000e+02 : f32
    %6 = vector.broadcast %cst_6 : f32 to vector<16x1xf32>
    %7 = arith.divf %5, %6 : vector<16x1xf32>
    %8 = vector.broadcast %7 : vector<16x1xf32> to vector<16x128xf32>
    %9 = arith.subf %1, %8 : vector<16x128xf32>
    %10 = arith.mulf %9, %9 : vector<16x128xf32>
    %cst_7 = arith.constant dense<0.000000e+00> : vector<16xf32>
    %11 = vector.multi_reduction <add>, %10, %cst_7 [1] : vector<16x128xf32> to vector<16xf32>
    %12 = vector.shape_cast %11 : vector<16xf32> to vector<16x1xf32>
    %cst_8 = arith.constant 1.270000e+02 : f32
    %13 = vector.broadcast %cst_8 : f32 to vector<16x1xf32>
    %14 = arith.divf %12, %13 : vector<16x1xf32>
    %15 = math.sqrt %14 : vector<16x1xf32>
    %cst_9 = arith.constant 9.99999997E-7 : f32
    %16 = vector.broadcast %cst_9 : f32 to vector<16x1xf32>
    %17 = arith.addf %15, %16 : vector<16x1xf32>
    %18 = tpu.reciprocal %17 {approx = true} : vector<16x1xf32> -> vector<16x1xf32>
    %19 = vector.broadcast %18 : vector<16x1xf32> to vector<16x128xf32>
    %20 = arith.mulf %9, %19 : vector<16x128xf32>
    %21 = vector.broadcast %2 : vector<1x128xf32> to vector<16x128xf32>
    %22 = arith.mulf %20, %21 : vector<16x128xf32>
    %23 = vector.broadcast %3 : vector<1x128xf32> to vector<16x128xf32>
    %24 = arith.addf %22, %23 : vector<16x128xf32>
    %25 = arith.truncf %24 : vector<16x128xf32> to vector<16x128xbf16>
    %c0_10 = arith.constant 0 : index
    %c0_11 = arith.constant 0 : index
    %26 = vector.load %arg4[%c0_10, %c0_11] : memref<128x384xbf16, #tpu.memory_space<vmem>>, vector<128x384xbf16>
    %cst_12 = arith.constant dense<0.000000e+00> : vector<16x384xf32>
    %27 = tpu.matmul %25, %26, %cst_12 {dimension_numbers = #tpu.dot_dimension_numbers<[1], [0], [0], [1], [0, 0, 1, 1], [], []>} : vector<16x128xbf16>, vector<128x384xbf16>, vector<16x384xf32> -> vector<16x384xf32>
    %c0_13 = arith.constant 0 : index
    %c0_14 = arith.constant 0 : index
    %28 = vector.load %arg5[%c0_13, %c0_14] : memref<1x384xf32, #tpu.memory_space<vmem>>, vector<1x384xf32>
    %29 = vector.broadcast %28 : vector<1x384xf32> to vector<16x384xf32>
    %30 = arith.addf %27, %29 : vector<16x384xf32>
    %31 = vector.extract_strided_slice %30 {offsets = [0, 0], sizes = [16, 32], strides = [1, 1]} : vector<16x384xf32> to vector<16x32xf32>
    %32 = vector.extract_strided_slice %30 {offsets = [0, 128], sizes = [16, 32], strides = [1, 1]} : vector<16x384xf32> to vector<16x32xf32>
    %33 = vector.extract_strided_slice %30 {offsets = [0, 256], sizes = [16, 32], strides = [1, 1]} : vector<16x384xf32> to vector<16x32xf32>
    %34 = arith.truncf %31 : vector<16x32xf32> to vector<16x32xbf16>
    %35 = arith.truncf %32 : vector<16x32xf32> to vector<16x32xbf16>
    %cst_15 = arith.constant dense<0.000000e+00> : vector<16x16xf32>
    %36 = tpu.matmul %34, %35, %cst_15 {dimension_numbers = #tpu.dot_dimension_numbers<[1], [1], [0], [0], [0, 0, 1, 0], [], []>} : vector<16x32xbf16>, vector<16x32xbf16>, vector<16x16xf32> -> vector<16x16xf32>
    %cst_16 = arith.constant dense<0xFF800000> : vector<16xf32>
    %37 = vector.multi_reduction <maximumf>, %36, %cst_16 [1] : vector<16x16xf32> to vector<16xf32>
    %38 = vector.shape_cast %37 : vector<16xf32> to vector<16x1xf32>
    %39 = vector.broadcast %38 : vector<16x1xf32> to vector<16x16xf32>
    %40 = arith.subf %36, %39 : vector<16x16xf32>
    %41 = math.exp %40 : vector<16x16xf32>
    %cst_17 = arith.constant dense<0.000000e+00> : vector<16xf32>
    %42 = vector.multi_reduction <add>, %41, %cst_17 [1] : vector<16x16xf32> to vector<16xf32>
    %43 = vector.shape_cast %42 : vector<16xf32> to vector<16x1xf32>
    %44 = tpu.reciprocal %43 {approx = true} : vector<16x1xf32> -> vector<16x1xf32>
    %45 = arith.truncf %41 : vector<16x16xf32> to vector<16x16xbf16>
    %46 = arith.truncf %33 : vector<16x32xf32> to vector<16x32xbf16>
    %cst_18 = arith.constant dense<0.000000e+00> : vector<16x32xf32>
    %47 = tpu.matmul %45, %46, %cst_18 {dimension_numbers = #tpu.dot_dimension_numbers<[1], [0], [0], [1], [0, 0, 1, 1], [], []>} : vector<16x16xbf16>, vector<16x32xbf16>, vector<16x32xf32> -> vector<16x32xf32>
    %48 = vector.broadcast %44 : vector<16x1xf32> to vector<16x32xf32>
    %49 = arith.mulf %47, %48 : vector<16x32xf32>
    %50 = arith.truncf %49 : vector<16x32xf32> to vector<16x32xbf16>
    %c0_19 = arith.constant 0 : index
    %c0_20 = arith.constant 0 : index
    %51 = vector.load %arg15[%c0_19, %c0_20] : memref<16x128xbf16, #tpu.memory_space<vmem>>, vector<16x32xbf16>
    tpu.vector_store %arg15[%c0_19, %c0_20], %50 {strides = array<i32>} : memref<16x128xbf16, #tpu.memory_space<vmem>>, vector<16x32xbf16>,
    %52 = vector.extract_strided_slice %30 {offsets = [0, 32], sizes = [16, 32], strides = [1, 1]} : vector<16x384xf32> to vector<16x32xf32>
    %53 = vector.extract_strided_slice %30 {offsets = [0, 160], sizes = [16, 32], strides = [1, 1]} : vector<16x384xf32> to vector<16x32xf32>
    %54 = vector.extract_strided_slice %30 {offsets = [0, 288], sizes = [16, 32], strides = [1, 1]} : vector<16x384xf32> to vector<16x32xf32>
    %55 = arith.truncf %52 : vector<16x32xf32> to vector<16x32xbf16>
    %56 = arith.truncf %53 : vector<16x32xf32> to vector<16x32xbf16>
    %cst_21 = arith.constant dense<0.000000e+00> : vector<16x16xf32>
    %57 = tpu.matmul %55, %56, %cst_21 {dimension_numbers = #tpu.dot_dimension_numbers<[1], [1], [0], [0], [0, 0, 1, 0], [], []>} : vector<16x32xbf16>, vector<16x32xbf16>, vector<16x16xf32> -> vector<16x16xf32>
    %cst_22 = arith.constant dense<0xFF800000> : vector<16xf32>
    %58 = vector.multi_reduction <maximumf>, %57, %cst_22 [1] : vector<16x16xf32> to vector<16xf32>
    %59 = vector.shape_cast %58 : vector<16xf32> to vector<16x1xf32>
    %60 = vector.broadcast %59 : vector<16x1xf32> to vector<16x16xf32>
    %61 = arith.subf %57, %60 : vector<16x16xf32>
    %62 = math.exp %61 : vector<16x16xf32>
    %cst_23 = arith.constant dense<0.000000e+00> : vector<16xf32>
    %63 = vector.multi_reduction <add>, %62, %cst_23 [1] : vector<16x16xf32> to vector<16xf32>
    %64 = vector.shape_cast %63 : vector<16xf32> to vector<16x1xf32>
    %65 = tpu.reciprocal %64 {approx = true} : vector<16x1xf32> -> vector<16x1xf32>
    %66 = arith.truncf %62 : vector<16x16xf32> to vector<16x16xbf16>
    %67 = arith.truncf %54 : vector<16x32xf32> to vector<16x32xbf16>
    %cst_24 = arith.constant dense<0.000000e+00> : vector<16x32xf32>
    %68 = tpu.matmul %66, %67, %cst_24 {dimension_numbers = #tpu.dot_dimension_numbers<[1], [0], [0], [1], [0, 0, 1, 1], [], []>} : vector<16x16xbf16>, vector<16x32xbf16>, vector<16x32xf32> -> vector<16x32xf32>
    %69 = vector.broadcast %65 : vector<16x1xf32> to vector<16x32xf32>
    %70 = arith.mulf %68, %69 : vector<16x32xf32>
    %71 = arith.truncf %70 : vector<16x32xf32> to vector<16x32xbf16>
    %c0_25 = arith.constant 0 : index
    %c32 = arith.constant 32 : index
    %72 = vector.load %arg15[%c0_25, %c32] : memref<16x128xbf16, #tpu.memory_space<vmem>>, vector<16x32xbf16>
    tpu.vector_store %arg15[%c0_25, %c32], %71 {strides = array<i32>} : memref<16x128xbf16, #tpu.memory_space<vmem>>, vector<16x32xbf16>,
    %73 = vector.extract_strided_slice %30 {offsets = [0, 64], sizes = [16, 32], strides = [1, 1]} : vector<16x384xf32> to vector<16x32xf32>
    %74 = vector.extract_strided_slice %30 {offsets = [0, 192], sizes = [16, 32], strides = [1, 1]} : vector<16x384xf32> to vector<16x32xf32>
    %75 = vector.extract_strided_slice %30 {offsets = [0, 320], sizes = [16, 32], strides = [1, 1]} : vector<16x384xf32> to vector<16x32xf32>
    %76 = arith.truncf %73 : vector<16x32xf32> to vector<16x32xbf16>
    %77 = arith.truncf %74 : vector<16x32xf32> to vector<16x32xbf16>
    %cst_26 = arith.constant dense<0.000000e+00> : vector<16x16xf32>
    %78 = tpu.matmul %76, %77, %cst_26 {dimension_numbers = #tpu.dot_dimension_numbers<[1], [1], [0], [0], [0, 0, 1, 0], [], []>} : vector<16x32xbf16>, vector<16x32xbf16>, vector<16x16xf32> -> vector<16x16xf32>
    %cst_27 = arith.constant dense<0xFF800000> : vector<16xf32>
    %79 = vector.multi_reduction <maximumf>, %78, %cst_27 [1] : vector<16x16xf32> to vector<16xf32>
    %80 = vector.shape_cast %79 : vector<16xf32> to vector<16x1xf32>
    %81 = vector.broadcast %80 : vector<16x1xf32> to vector<16x16xf32>
    %82 = arith.subf %78, %81 : vector<16x16xf32>
    %83 = math.exp %82 : vector<16x16xf32>
    %cst_28 = arith.constant dense<0.000000e+00> : vector<16xf32>
    %84 = vector.multi_reduction <add>, %83, %cst_28 [1] : vector<16x16xf32> to vector<16xf32>
    %85 = vector.shape_cast %84 : vector<16xf32> to vector<16x1xf32>
    %86 = tpu.reciprocal %85 {approx = true} : vector<16x1xf32> -> vector<16x1xf32>
    %87 = arith.truncf %83 : vector<16x16xf32> to vector<16x16xbf16>
    %88 = arith.truncf %75 : vector<16x32xf32> to vector<16x32xbf16>
    %cst_29 = arith.constant dense<0.000000e+00> : vector<16x32xf32>
    %89 = tpu.matmul %87, %88, %cst_29 {dimension_numbers = #tpu.dot_dimension_numbers<[1], [0], [0], [1], [0, 0, 1, 1], [], []>} : vector<16x16xbf16>, vector<16x32xbf16>, vector<16x32xf32> -> vector<16x32xf32>
    %90 = vector.broadcast %86 : vector<16x1xf32> to vector<16x32xf32>
    %91 = arith.mulf %89, %90 : vector<16x32xf32>
    %92 = arith.truncf %91 : vector<16x32xf32> to vector<16x32xbf16>
    %c0_30 = arith.constant 0 : index
    %c64 = arith.constant 64 : index
    %93 = vector.load %arg15[%c0_30, %c64] : memref<16x128xbf16, #tpu.memory_space<vmem>>, vector<16x32xbf16>
    tpu.vector_store %arg15[%c0_30, %c64], %92 {strides = array<i32>} : memref<16x128xbf16, #tpu.memory_space<vmem>>, vector<16x32xbf16>,
    %94 = vector.extract_strided_slice %30 {offsets = [0, 96], sizes = [16, 32], strides = [1, 1]} : vector<16x384xf32> to vector<16x32xf32>
    %95 = vector.extract_strided_slice %30 {offsets = [0, 224], sizes = [16, 32], strides = [1, 1]} : vector<16x384xf32> to vector<16x32xf32>
    %96 = vector.extract_strided_slice %30 {offsets = [0, 352], sizes = [16, 32], strides = [1, 1]} : vector<16x384xf32> to vector<16x32xf32>
    %97 = arith.truncf %94 : vector<16x32xf32> to vector<16x32xbf16>
    %98 = arith.truncf %95 : vector<16x32xf32> to vector<16x32xbf16>
    %cst_31 = arith.constant dense<0.000000e+00> : vector<16x16xf32>
    %99 = tpu.matmul %97, %98, %cst_31 {dimension_numbers = #tpu.dot_dimension_numbers<[1], [1], [0], [0], [0, 0, 1, 0], [], []>} : vector<16x32xbf16>, vector<16x32xbf16>, vector<16x16xf32> -> vector<16x16xf32>
    %cst_32 = arith.constant dense<0xFF800000> : vector<16xf32>
    %100 = vector.multi_reduction <maximumf>, %99, %cst_32 [1] : vector<16x16xf32> to vector<16xf32>
    %101 = vector.shape_cast %100 : vector<16xf32> to vector<16x1xf32>
    %102 = vector.broadcast %101 : vector<16x1xf32> to vector<16x16xf32>
    %103 = arith.subf %99, %102 : vector<16x16xf32>
    %104 = math.exp %103 : vector<16x16xf32>
    %cst_33 = arith.constant dense<0.000000e+00> : vector<16xf32>
    %105 = vector.multi_reduction <add>, %104, %cst_33 [1] : vector<16x16xf32> to vector<16xf32>
    %106 = vector.shape_cast %105 : vector<16xf32> to vector<16x1xf32>
    %107 = tpu.reciprocal %106 {approx = true} : vector<16x1xf32> -> vector<16x1xf32>
    %108 = arith.truncf %104 : vector<16x16xf32> to vector<16x16xbf16>
    %109 = arith.truncf %96 : vector<16x32xf32> to vector<16x32xbf16>
    %cst_34 = arith.constant dense<0.000000e+00> : vector<16x32xf32>
    %110 = tpu.matmul %108, %109, %cst_34 {dimension_numbers = #tpu.dot_dimension_numbers<[1], [0], [0], [1], [0, 0, 1, 1], [], []>} : vector<16x16xbf16>, vector<16x32xbf16>, vector<16x32xf32> -> vector<16x32xf32>
    %111 = vector.broadcast %107 : vector<16x1xf32> to vector<16x32xf32>
    %112 = arith.mulf %110, %111 : vector<16x32xf32>
    %113 = arith.truncf %112 : vector<16x32xf32> to vector<16x32xbf16>
    %c0_35 = arith.constant 0 : index
    %c96 = arith.constant 96 : index
    %114 = vector.load %arg15[%c0_35, %c96] : memref<16x128xbf16, #tpu.memory_space<vmem>>, vector<16x32xbf16>
    tpu.vector_store %arg15[%c0_35, %c96], %113 {strides = array<i32>} : memref<16x128xbf16, #tpu.memory_space<vmem>>, vector<16x32xbf16>,
    %c0_36 = arith.constant 0 : index
    %c0_37 = arith.constant 0 : index
    %115 = vector.load %arg15[%c0_36, %c0_37] : memref<16x128xbf16, #tpu.memory_space<vmem>>, vector<16x128xbf16>
    %c0_38 = arith.constant 0 : index
    %c0_39 = arith.constant 0 : index
    %116 = vector.load %arg6[%c0_38, %c0_39] : memref<128x128xbf16, #tpu.memory_space<vmem>>, vector<128x128xbf16>
    %cst_40 = arith.constant dense<0.000000e+00> : vector<16x128xf32>
    %117 = tpu.matmul %115, %116, %cst_40 {dimension_numbers = #tpu.dot_dimension_numbers<[1], [0], [0], [1], [0, 0, 1, 1], [], []>} : vector<16x128xbf16>, vector<128x128xbf16>, vector<16x128xf32> -> vector<16x128xf32>
    %c0_41 = arith.constant 0 : index
    %c0_42 = arith.constant 0 : index
    %118 = vector.load %arg7[%c0_41, %c0_42] : memref<1x128xf32, #tpu.memory_space<vmem>>, vector<1x128xf32>
    %119 = vector.broadcast %118 : vector<1x128xf32> to vector<16x128xf32>
    %120 = arith.addf %117, %119 : vector<16x128xf32>
    %121 = arith.addf %1, %120 : vector<16x128xf32>
    %c0_43 = arith.constant 0 : index
    %c0_44 = arith.constant 0 : index
    %122 = vector.load %arg8[%c0_43, %c0_44] : memref<1x128xf32, #tpu.memory_space<vmem>>, vector<1x128xf32>
    %c0_45 = arith.constant 0 : index
    %c0_46 = arith.constant 0 : index
    %123 = vector.load %arg9[%c0_45, %c0_46] : memref<1x128xf32, #tpu.memory_space<vmem>>, vector<1x128xf32>
    %cst_47 = arith.constant dense<0.000000e+00> : vector<16xf32>
    %124 = vector.multi_reduction <add>, %121, %cst_47 [1] : vector<16x128xf32> to vector<16xf32>
    %125 = vector.shape_cast %124 : vector<16xf32> to vector<16x1xf32>
    %cst_48 = arith.constant 1.280000e+02 : f32
    %126 = vector.broadcast %cst_48 : f32 to vector<16x1xf32>
    %127 = arith.divf %125, %126 : vector<16x1xf32>
    %128 = vector.broadcast %127 : vector<16x1xf32> to vector<16x128xf32>
    %129 = arith.subf %121, %128 : vector<16x128xf32>
    %130 = arith.mulf %129, %129 : vector<16x128xf32>
    %cst_49 = arith.constant dense<0.000000e+00> : vector<16xf32>
    %131 = vector.multi_reduction <add>, %130, %cst_49 [1] : vector<16x128xf32> to vector<16xf32>
    %132 = vector.shape_cast %131 : vector<16xf32> to vector<16x1xf32>
    %cst_50 = arith.constant 1.270000e+02 : f32
    %133 = vector.broadcast %cst_50 : f32 to vector<16x1xf32>
    %134 = arith.divf %132, %133 : vector<16x1xf32>
    %135 = math.sqrt %134 : vector<16x1xf32>
    %cst_51 = arith.constant 9.99999997E-7 : f32
    %136 = vector.broadcast %cst_51 : f32 to vector<16x1xf32>
    %137 = arith.addf %135, %136 : vector<16x1xf32>
    %138 = tpu.reciprocal %137 {approx = true} : vector<16x1xf32> -> vector<16x1xf32>
    %139 = vector.broadcast %138 : vector<16x1xf32> to vector<16x128xf32>
    %140 = arith.mulf %129, %139 : vector<16x128xf32>
    %141 = vector.broadcast %122 : vector<1x128xf32> to vector<16x128xf32>
    %142 = arith.mulf %140, %141 : vector<16x128xf32>
    %143 = vector.broadcast %123 : vector<1x128xf32> to vector<16x128xf32>
    %144 = arith.addf %142, %143 : vector<16x128xf32>
    %145 = arith.truncf %144 : vector<16x128xf32> to vector<16x128xbf16>
    %c0_52 = arith.constant 0 : index
    %c0_53 = arith.constant 0 : index
    %146 = vector.load %arg10[%c0_52, %c0_53] : memref<128x256xbf16, #tpu.memory_space<vmem>>, vector<128x256xbf16>
    %cst_54 = arith.constant dense<0.000000e+00> : vector<16x256xf32>
    %147 = tpu.matmul %145, %146, %cst_54 {dimension_numbers = #tpu.dot_dimension_numbers<[1], [0], [0], [1], [0, 0, 1, 1], [], []>} : vector<16x128xbf16>, vector<128x256xbf16>, vector<16x256xf32> -> vector<16x256xf32>
    %c0_55 = arith.constant 0 : index
    %c0_56 = arith.constant 0 : index
    %148 = vector.load %arg11[%c0_55, %c0_56] : memref<1x256xf32, #tpu.memory_space<vmem>>, vector<1x256xf32>
    %149 = vector.broadcast %148 : vector<1x256xf32> to vector<16x256xf32>
    %150 = arith.addf %147, %149 : vector<16x256xf32>
    %cst_57 = arith.constant 0.000000e+00 : f32
    %151 = vector.broadcast %cst_57 : f32 to vector<16x256xf32>
    %152 = arith.maximumf %150, %151 : vector<16x256xf32>
    %153 = arith.truncf %152 : vector<16x256xf32> to vector<16x256xbf16>
    %c0_58 = arith.constant 0 : index
    %c0_59 = arith.constant 0 : index
    %154 = vector.load %arg12[%c0_58, %c0_59] : memref<256x128xbf16, #tpu.memory_space<vmem>>, vector<256x128xbf16>
    %cst_60 = arith.constant dense<0.000000e+00> : vector<16x128xf32>
    %155 = tpu.matmul %153, %154, %cst_60 {dimension_numbers = #tpu.dot_dimension_numbers<[1], [0], [0], [1], [0, 0, 1, 1], [], []>} : vector<16x256xbf16>, vector<256x128xbf16>, vector<16x128xf32> -> vector<16x128xf32>
    %c0_61 = arith.constant 0 : index
    %c0_62 = arith.constant 0 : index
    %156 = vector.load %arg13[%c0_61, %c0_62] : memref<1x128xf32, #tpu.memory_space<vmem>>, vector<1x128xf32>
    %157 = vector.broadcast %156 : vector<1x128xf32> to vector<16x128xf32>
    %158 = arith.addf %155, %157 : vector<16x128xf32>
    %159 = arith.addf %121, %158 : vector<16x128xf32>
    %c0_63 = arith.constant 0 : index
    %c0_64 = arith.constant 0 : index
    %c0_65 = arith.constant 0 : index
    %160 = vector.load %arg14[%c0_63, %c0_64, %c0_65] : memref<1x16x128xf32, #tpu.memory_space<vmem>>, vector<1x16x128xf32>
    %161 = vector.shape_cast %160 : vector<1x16x128xf32> to vector<16x128xf32>
    %162 = vector.shape_cast %159 : vector<16x128xf32> to vector<1x16x128xf32>
    tpu.vector_store %arg14[%c0_63, %c0_64, %c0_65], %162 {strides = array<i32>} : memref<1x16x128xf32, #tpu.memory_space<vmem>>, vector<1x16x128xf32>,
    return
  }
  func.func @transform_0(%arg0: i32) -> (i32, i32, i32) {
    %c0_i32 = arith.constant 0 : i32
    %c0_i32_0 = arith.constant 0 : i32
    %c0_i32_1 = arith.constant 0 : i32
    return %arg0, %c0_i32, %c0_i32_0 : i32, i32, i32
  }
  func.func @transform_1(%arg0: i32) -> (i32, i32) {
    %c0_i32 = arith.constant 0 : i32
    %c0_i32_0 = arith.constant 0 : i32
    %c0_i32_1 = arith.constant 0 : i32
    return %c0_i32, %c0_i32_0 : i32, i32
  }
  func.func @transform_2(%arg0: i32) -> (i32, i32) {
    %c0_i32 = arith.constant 0 : i32
    %c0_i32_0 = arith.constant 0 : i32
    %c0_i32_1 = arith.constant 0 : i32
    return %c0_i32, %c0_i32_0 : i32, i32
  }
  func.func @transform_3(%arg0: i32) -> (i32, i32) {
    %c0_i32 = arith.constant 0 : i32
    %c0_i32_0 = arith.constant 0 : i32
    %c0_i32_1 = arith.constant 0 : i32
    return %c0_i32, %c0_i32_0 : i32, i32
  }
  func.func @transform_4(%arg0: i32) -> (i32, i32) {
    %c0_i32 = arith.constant 0 : i32
    %c0_i32_0 = arith.constant 0 : i32
    %c0_i32_1 = arith.constant 0 : i32
    return %c0_i32, %c0_i32_0 : i32, i32
  }
  func.func @transform_5(%arg0: i32) -> (i32, i32) {
    %c0_i32 = arith.constant 0 : i32
    %c0_i32_0 = arith.constant 0 : i32
    %c0_i32_1 = arith.constant 0 : i32
    return %c0_i32, %c0_i32_0 : i32, i32
  }
  func.func @transform_6(%arg0: i32) -> (i32, i32) {
    %c0_i32 = arith.constant 0 : i32
    %c0_i32_0 = arith.constant 0 : i32
    %c0_i32_1 = arith.constant 0 : i32
    return %c0_i32, %c0_i32_0 : i32, i32
  }
  func.func @transform_7(%arg0: i32) -> (i32, i32) {
    %c0_i32 = arith.constant 0 : i32
    %c0_i32_0 = arith.constant 0 : i32
    %c0_i32_1 = arith.constant 0 : i32
    return %c0_i32, %c0_i32_0 : i32, i32
  }
  func.func @transform_8(%arg0: i32) -> (i32, i32) {
    %c0_i32 = arith.constant 0 : i32
    %c0_i32_0 = arith.constant 0 : i32
    %c0_i32_1 = arith.constant 0 : i32
    return %c0_i32, %c0_i32_0 : i32, i32
  }
  func.func @transform_9(%arg0: i32) -> (i32, i32) {
    %c0_i32 = arith.constant 0 : i32
    %c0_i32_0 = arith.constant 0 : i32
    %c0_i32_1 = arith.constant 0 : i32
    return %c0_i32, %c0_i32_0 : i32, i32
  }
  func.func @transform_10(%arg0: i32) -> (i32, i32) {
    %c0_i32 = arith.constant 0 : i32
    %c0_i32_0 = arith.constant 0 : i32
    %c0_i32_1 = arith.constant 0 : i32
    return %c0_i32, %c0_i32_0 : i32, i32
  }
  func.func @transform_11(%arg0: i32) -> (i32, i32) {
    %c0_i32 = arith.constant 0 : i32
    %c0_i32_0 = arith.constant 0 : i32
    %c0_i32_1 = arith.constant 0 : i32
    return %c0_i32, %c0_i32_0 : i32, i32
  }
  func.func @transform_12(%arg0: i32) -> (i32, i32) {
    %c0_i32 = arith.constant 0 : i32
    %c0_i32_0 = arith.constant 0 : i32
    %c0_i32_1 = arith.constant 0 : i32
    return %c0_i32, %c0_i32_0 : i32, i32
  }
  func.func @transform_13(%arg0: i32) -> (i32, i32, i32) {
    %c0_i32 = arith.constant 0 : i32
    %c0_i32_0 = arith.constant 0 : i32
    %c0_i32_1 = arith.constant 0 : i32
    return %arg0, %c0_i32, %c0_i32_0 : i32, i32, i32
  }
}

</mosaic_0001>

<llo_original>
// kernel: tpu_custom_call.1
$region0: #{tpu_custom_call.1}
  #allocation0 [shape = 'u32[]', space=smem, size = 0x4, offset = 0x4, fixed_abs, tag = 'smem constant byte address 0x4 - core index']
  #allocation1 [shape = 'u32[144,128]{1,0:T(1,128)}', space=vmem, size = 0x12000, scoped, tag = 'internal scratch']
  #allocation2 [shape = 'bf16[16,128]{1,0:T(16,128)(2,1)}', space=vmem, size = 0x1000, scoped, tag = 'scratch operand']
  %s0 = inlined_call_operand.hbm [shape: f32[2,16,128], index: 0, kind: input, shape index: {}]
  %s1 = inlined_call_operand.hbm [shape: f32[1,128], index: 1, kind: input, shape index: {}]
  %s2 = inlined_call_operand.hbm [shape: f32[1,128], index: 2, kind: input, shape index: {}]
  %s3 = inlined_call_operand.hbm [shape: bf16[128,384], index: 3, kind: input, shape index: {}]
  %s4 = inlined_call_operand.hbm [shape: f32[1,384], index: 4, kind: input, shape index: {}]
  %s5 = inlined_call_operand.hbm [shape: bf16[128,128], index: 5, kind: input, shape index: {}]
  %s6 = inlined_call_operand.hbm [shape: f32[1,128], index: 6, kind: input, shape index: {}]
  %s7 = inlined_call_operand.hbm [shape: f32[1,128], index: 7, kind: input, shape index: {}]
  %s8 = inlined_call_operand.hbm [shape: f32[1,128], index: 8, kind: input, shape index: {}]
  %s9 = inlined_call_operand.hbm [shape: bf16[128,256], index: 9, kind: input, shape index: {}]
  %s10 = inlined_call_operand.hbm [shape: f32[1,256], index: 10, kind: input, shape index: {}]
  %s11 = inlined_call_operand.hbm [shape: bf16[256,128], index: 11, kind: input, shape index: {}]
  %s12 = inlined_call_operand.hbm [shape: f32[1,128], index: 12, kind: input, shape index: {}]
  %s13 = inlined_call_operand.hbm [shape: f32[2,16,128], index: 13, kind: output, shape index: {}]
  %s14 = sld [smem:[#allocation0]]
  $region137: #{tpu_custom_call.1} parent=0
    _
  %s16 = ssub.s32 1, %s14
  %s17 = scalar_select 0, %s16, %s14
  $region1: #{tpu_custom_call.1} parent=0
    #allocation3 [shape = 'u8[16384]{0}', space=vmem, size = 0x4000, scoped, tag = 'input window, operand 0']
    #allocation4 [shape = 's32[2]{0}', space=sflag, size = 0x8, scoped, tag = 'scoped memory for tpu_custom_call.1']
    #allocation5 [shape = 's32[2]{0}', space=sflag, size = 0x8, scoped, tag = 'scoped memory for tpu_custom_call.1']
    #allocation6 [shape = 'u8[512]{0}', space=vmem, size = 0x400, scoped, tag = 'input window, operand 1, single buffered']
    #allocation7 [shape = 's32[1]{0}', space=sflag, size = 0x4, scoped, tag = 'scoped memory for tpu_custom_call.1']
    #allocation8 [shape = 'u8[512]{0}', space=vmem, size = 0x400, scoped, tag = 'input window, operand 2, single buffered']
    #allocation9 [shape = 'u8[98304]{0}', space=vmem, size = 0x18000, scoped, tag = 'input window, operand 3, single buffered']
    #allocation10 [shape = 's32[1]{0}', space=sflag, size = 0x4, scoped, tag = 'scoped memory for tpu_custom_call.1']
    #allocation11 [shape = 'u8[1536]{0}', space=vmem, size = 0x800, scoped, tag = 'input window, operand 4, single buffered']
    #allocation12 [shape = 'u8[32768]{0}', space=vmem, size = 0x8000, scoped, tag = 'input window, operand 5, single buffered']
    #allocation13 [shape = 's32[1]{0}', space=sflag, size = 0x4, scoped, tag = 'scoped memory for tpu_custom_call.1']
    #allocation14 [shape = 'u8[512]{0}', space=vmem, size = 0x400, scoped, tag = 'input window, operand 6, single buffered']
    #allocation15 [shape = 'u8[512]{0}', space=vmem, size = 0x400, scoped, tag = 'input window, operand 7, single buffered']
    #allocation16 [shape = 's32[1]{0}', space=sflag, size = 0x4, scoped, tag = 'scoped memory for tpu_custom_call.1']
    #allocation17 [shape = 'u8[512]{0}', space=vmem, size = 0x400, scoped, tag = 'input window, operand 8, single buffered']
    #allocation18 [shape = 'u8[65536]{0}', space=vmem, size = 0x10000, scoped, tag = 'input window, operand 9, single buffered']
    #allocation19 [shape = 's32[1]{0}', space=sflag, size = 0x4, scoped, tag = 'scoped memory for tpu_custom_call.1']
    #allocation20 [shape = 'u8[1024]{0}', space=vmem, size = 0x400, scoped, tag = 'input window, operand 10, single buffered']
    #allocation21 [shape = 'u8[65536]{0}', space=vmem, size = 0x10000, scoped, tag = 'input window, operand 11, single buffered']
    #allocation22 [shape = 's32[1]{0}', space=sflag, size = 0x4, scoped, tag = 'scoped memory for tpu_custom_call.1']
    #allocation23 [shape = 'u8[512]{0}', space=vmem, size = 0x400, scoped, tag = 'input window, operand 12, single buffered']
    #allocation24 [shape = 'u8[16384]{0}', space=vmem, size = 0x4000, scoped, tag = 'output window, operand 0']
    %18 = vsyncpa [#allocation4], 0
    %s19 = scalar_lea.sflag [#allocation4], 1
    %20 = vsyncpa %s19, 0
    %21 = vsyncpa [#allocation7], 0
    %22 = vsyncpa [#allocation10], 0
    %23 = vsyncpa [#allocation13], 0
    %24 = vsyncpa [#allocation16], 0
    %25 = vsyncpa [#allocation19], 0
    %26 = vsyncpa [#allocation22], 0
    %27 = vsyncpa [#allocation5], 0
    %s28 = scalar_lea.sflag [#allocation5], 1
    %29 = vsyncpa %s28, 0
    loop: start=0, step=1, limit=4
    $region2: #{tpu_custom_call.1} parent=1 // loop_pre_header
      _
    $region3: #{tpu_custom_call.1} parent=1 // loop_header
      %s31 = sphi 0, %s35
      %p32 = scmp.ge.s32.totalorder %s31, 4
      %s41 = sphi 0, %s43
      %s44 = sphi 0, %s41
      %s45 = sphi 0, %s44
      %s61 = sphi 0, %s45
      %s65 = sphi 0, %s65
      %s67 = sphi 0, %s65
      %s68 = sphi 0, %s67
      %s82 = sphi 0, %s68
      %s86 = sphi 0, %s86
      %s88 = sphi 0, %s86
      %s89 = sphi 0, %s88
      %s103 = sphi 0, %s89
      %s107 = sphi 0, %s107
      %s109 = sphi 0, %s107
      %s110 = sphi 0, %s109
      %s124 = sphi 0, %s110
      %s128 = sphi 0, %s128
      %s130 = sphi 0, %s128
      %s131 = sphi 0, %s130
      %s145 = sphi 0, %s131
      %s149 = sphi 0, %s149
      %s151 = sphi 0, %s149
      %s152 = sphi 0, %s151
      %s166 = sphi 0, %s152
      %s170 = sphi 0, %s170
      %s172 = sphi 0, %s170
      %s173 = sphi 0, %s172
      %s187 = sphi 0, %s173
      %s191 = sphi 0, %s191
      %s193 = sphi 0, %s191
      %s194 = sphi 0, %s193
      %s208 = sphi 0, %s194
      %s212 = sphi 0, %s212
      %s214 = sphi 0, %s212
      %s215 = sphi 0, %s214
      %s229 = sphi 0, %s215
      %s233 = sphi 0, %s233
      %s235 = sphi 0, %s233
      %s236 = sphi 0, %s235
      %s250 = sphi 0, %s236
      %s254 = sphi 0, %s254
      %s256 = sphi 0, %s254
      %s257 = sphi 0, %s256
      %s271 = sphi 0, %s257
      %s275 = sphi 0, %s275
      %s277 = sphi 0, %s275
      %s278 = sphi 0, %s277
      %s292 = sphi 0, %s278
      %s296 = sphi 0, %s296
      %s298 = sphi 0, %s296
      %s299 = sphi 0, %s298
      %s313 = sphi 0, %s299
      %s319 = sphi 0, %s321
      %s322 = sphi 0, %s319
      %s323 = sphi 0, %s322
      %s339 = sphi 0, %s323
    $region4: #{tpu_custom_call.1} parent=1 // loop_header_branch
      %34 = sbr.rel (%p32) target = $region8
    $region5: #{tpu_custom_call.1} parent=1 // loop_body
      %s36 = ssub.s32 %s31, 1
      %s37 = ssub.s32 %s31, 2
      %s38 = sadd.s32 %s31, 1
      %s39 = ssub.s32 %s31, %s38
      %p40 = scmp.eq.s32.totalorder %s39, 0
      %s42 = sadd.s32 %s41, 1
      %s43 = scalar_select %p40, %s41, %s42
      %p46 = pneg %p40
      %p47 = scmp.eq.s32.totalorder %s31, 1
      %p48 = por %p46, %p47
      %p49 = scmp.ne.s32.totalorder %s41, %s44
      %p50 = scmp.eq.s32.totalorder %s31, 0
      %p51 = por %p49, %p50
      %p52 = scmp.ne.s32.totalorder %s41, %s44
      %p53 = scmp.eq.s32.totalorder %s36, 1
      %p54 = por %p52, %p53
      %p55 = scmp.ne.s32.totalorder %s44, %s45
      %p56 = scmp.eq.s32.totalorder %s36, 0
      %p57 = por %p55, %p56
      %p58 = scmp.ne.s32.totalorder %s44, %s45
      %p59 = scmp.eq.s32.totalorder %s37, 1
      %p60 = por %p58, %p59
      %p62 = scmp.ne.s32.totalorder %s45, %s61
      %p63 = scmp.eq.s32.totalorder %s37, 0
      %p64 = por %p62, %p63
      %s66 = sadd.s32 %s65, 1
      %p69 = scmp.eq.s32.totalorder %s31, 1
      %p70 = scmp.ne.s32.totalorder %s65, %s67
      %p71 = scmp.eq.s32.totalorder %s31, 0
      %p72 = por %p70, %p71
      %p73 = scmp.ne.s32.totalorder %s65, %s67
      %p74 = scmp.eq.s32.totalorder %s36, 1
      %p75 = por %p73, %p74
      %p76 = scmp.ne.s32.totalorder %s67, %s68
      %p77 = scmp.eq.s32.totalorder %s36, 0
      %p78 = por %p76, %p77
      %p79 = scmp.ne.s32.totalorder %s67, %s68
      %p80 = scmp.eq.s32.totalorder %s37, 1
      %p81 = por %p79, %p80
      %p83 = scmp.ne.s32.totalorder %s68, %s82
      %p84 = scmp.eq.s32.totalorder %s37, 0
      %p85 = por %p83, %p84
      %s87 = sadd.s32 %s86, 1
      %p90 = scmp.eq.s32.totalorder %s31, 1
      %p91 = scmp.ne.s32.totalorder %s86, %s88
      %p92 = scmp.eq.s32.totalorder %s31, 0
      %p93 = por %p91, %p92
      %p94 = scmp.ne.s32.totalorder %s86, %s88
      %p95 = scmp.eq.s32.totalorder %s36, 1
      %p96 = por %p94, %p95
      %p97 = scmp.ne.s32.totalorder %s88, %s89
      %p98 = scmp.eq.s32.totalorder %s36, 0
      %p99 = por %p97, %p98
      %p100 = scmp.ne.s32.totalorder %s88, %s89
      %p101 = scmp.eq.s32.totalorder %s37, 1
      %p102 = por %p100, %p101
      %p104 = scmp.ne.s32.totalorder %s89, %s103
      %p105 = scmp.eq.s32.totalorder %s37, 0
      %p106 = por %p104, %p105
      %s108 = sadd.s32 %s107, 1
      %p111 = scmp.eq.s32.totalorder %s31, 1
      %p112 = scmp.ne.s32.totalorder %s107, %s109
      %p113 = scmp.eq.s32.totalorder %s31, 0
      %p114 = por %p112, %p113
      %p115 = scmp.ne.s32.totalorder %s107, %s109
      %p116 = scmp.eq.s32.totalorder %s36, 1
      %p117 = por %p115, %p116
      %p118 = scmp.ne.s32.totalorder %s109, %s110
      %p119 = scmp.eq.s32.totalorder %s36, 0
      %p120 = por %p118, %p119
      %p121 = scmp.ne.s32.totalorder %s109, %s110
      %p122 = scmp.eq.s32.totalorder %s37, 1
      %p123 = por %p121, %p122
      %p125 = scmp.ne.s32.totalorder %s110, %s124
      %p126 = scmp.eq.s32.totalorder %s37, 0
      %p127 = por %p125, %p126
      %s129 = sadd.s32 %s128, 1
      %p132 = scmp.eq.s32.totalorder %s31, 1
      %p133 = scmp.ne.s32.totalorder %s128, %s130
      %p134 = scmp.eq.s32.totalorder %s31, 0
      %p135 = por %p133, %p134
      %p136 = scmp.ne.s32.totalorder %s128, %s130
      %p137 = scmp.eq.s32.totalorder %s36, 1
      %p138 = por %p136, %p137
      %p139 = scmp.ne.s32.totalorder %s130, %s131
      %p140 = scmp.eq.s32.totalorder %s36, 0
      %p141 = por %p139, %p140
      %p142 = scmp.ne.s32.totalorder %s130, %s131
      %p143 = scmp.eq.s32.totalorder %s37, 1
      %p144 = por %p142, %p143
      %p146 = scmp.ne.s32.totalorder %s131, %s145
      %p147 = scmp.eq.s32.totalorder %s37, 0
      %p148 = por %p146, %p147
      %s150 = sadd.s32 %s149, 1
      %p153 = scmp.eq.s32.totalorder %s31, 1
      %p154 = scmp.ne.s32.totalorder %s149, %s151
      %p155 = scmp.eq.s32.totalorder %s31, 0
      %p156 = por %p154, %p155
      %p157 = scmp.ne.s32.totalorder %s149, %s151
      %p158 = scmp.eq.s32.totalorder %s36, 1
      %p159 = por %p157, %p158
      %p160 = scmp.ne.s32.totalorder %s151, %s152
      %p161 = scmp.eq.s32.totalorder %s36, 0
      %p162 = por %p160, %p161
      %p163 = scmp.ne.s32.totalorder %s151, %s152
      %p164 = scmp.eq.s32.totalorder %s37, 1
      %p165 = por %p163, %p164
      %p167 = scmp.ne.s32.totalorder %s152, %s166
      %p168 = scmp.eq.s32.totalorder %s37, 0
      %p169 = por %p167, %p168
      %s171 = sadd.s32 %s170, 1
      %p174 = scmp.eq.s32.totalorder %s31, 1
      %p175 = scmp.ne.s32.totalorder %s170, %s172
      %p176 = scmp.eq.s32.totalorder %s31, 0
      %p177 = por %p175, %p176
      %p178 = scmp.ne.s32.totalorder %s170, %s172
      %p179 = scmp.eq.s32.totalorder %s36, 1
      %p180 = por %p178, %p179
      %p181 = scmp.ne.s32.totalorder %s172, %s173
      %p182 = scmp.eq.s32.totalorder %s36, 0
      %p183 = por %p181, %p182
      %p184 = scmp.ne.s32.totalorder %s172, %s173
      %p185 = scmp.eq.s32.totalorder %s37, 1
      %p186 = por %p184, %p185
      %p188 = scmp.ne.s32.totalorder %s173, %s187
      %p189 = scmp.eq.s32.totalorder %s37, 0
      %p190 = por %p188, %p189
      %s192 = sadd.s32 %s191, 1
      %p195 = scmp.eq.s32.totalorder %s31, 1
      %p196 = scmp.ne.s32.totalorder %s191, %s193
      %p197 = scmp.eq.s32.totalorder %s31, 0
      %p198 = por %p196, %p197
      %p199 = scmp.ne.s32.totalorder %s191, %s193
      %p200 = scmp.eq.s32.totalorder %s36, 1
      %p201 = por %p199, %p200
      %p202 = scmp.ne.s32.totalorder %s193, %s194
      %p203 = scmp.eq.s32.totalorder %s36, 0
      %p204 = por %p202, %p203
      %p205 = scmp.ne.s32.totalorder %s193, %s194
      %p206 = scmp.eq.s32.totalorder %s37, 1
      %p207 = por %p205, %p206
      %p209 = scmp.ne.s32.totalorder %s194, %s208
      %p210 = scmp.eq.s32.totalorder %s37, 0
      %p211 = por %p209, %p210
      %s213 = sadd.s32 %s212, 1
      %p216 = scmp.eq.s32.totalorder %s31, 1
      %p217 = scmp.ne.s32.totalorder %s212, %s214
      %p218 = scmp.eq.s32.totalorder %s31, 0
      %p219 = por %p217, %p218
      %p220 = scmp.ne.s32.totalorder %s212, %s214
      %p221 = scmp.eq.s32.totalorder %s36, 1
      %p222 = por %p220, %p221
      %p223 = scmp.ne.s32.totalorder %s214, %s215
      %p224 = scmp.eq.s32.totalorder %s36, 0
      %p225 = por %p223, %p224
      %p226 = scmp.ne.s32.totalorder %s214, %s215
      %p227 = scmp.eq.s32.totalorder %s37, 1
      %p228 = por %p226, %p227
      %p230 = scmp.ne.s32.totalorder %s215, %s229
      %p231 = scmp.eq.s32.totalorder %s37, 0
      %p232 = por %p230, %p231
      %s234 = sadd.s32 %s233, 1
      %p237 = scmp.eq.s32.totalorder %s31, 1
      %p238 = scmp.ne.s32.totalorder %s233, %s235
      %p239 = scmp.eq.s32.totalorder %s31, 0
      %p240 = por %p238, %p239
      %p241 = scmp.ne.s32.totalorder %s233, %s235
      %p242 = scmp.eq.s32.totalorder %s36, 1
      %p243 = por %p241, %p242
      %p244 = scmp.ne.s32.totalorder %s235, %s236
      %p245 = scmp.eq.s32.totalorder %s36, 0
      %p246 = por %p244, %p245
      %p247 = scmp.ne.s32.totalorder %s235, %s236
      %p248 = scmp.eq.s32.totalorder %s37, 1
      %p249 = por %p247, %p248
      %p251 = scmp.ne.s32.totalorder %s236, %s250
      %p252 = scmp.eq.s32.totalorder %s37, 0
      %p253 = por %p251, %p252
      %s255 = sadd.s32 %s254, 1
      %p258 = scmp.eq.s32.totalorder %s31, 1
      %p259 = scmp.ne.s32.totalorder %s254, %s256
      %p260 = scmp.eq.s32.totalorder %s31, 0
      %p261 = por %p259, %p260
      %p262 = scmp.ne.s32.totalorder %s254, %s256
      %p263 = scmp.eq.s32.totalorder %s36, 1
      %p264 = por %p262, %p263
      %p265 = scmp.ne.s32.totalorder %s256, %s257
      %p266 = scmp.eq.s32.totalorder %s36, 0
      %p267 = por %p265, %p266
      %p268 = scmp.ne.s32.totalorder %s256, %s257
      %p269 = scmp.eq.s32.totalorder %s37, 1
      %p270 = por %p268, %p269
      %p272 = scmp.ne.s32.totalorder %s257, %s271
      %p273 = scmp.eq.s32.totalorder %s37, 0
      %p274 = por %p272, %p273
      %s276 = sadd.s32 %s275, 1
      %p279 = scmp.eq.s32.totalorder %s31, 1
      %p280 = scmp.ne.s32.totalorder %s275, %s277
      %p281 = scmp.eq.s32.totalorder %s31, 0
      %p282 = por %p280, %p281
      %p283 = scmp.ne.s32.totalorder %s275, %s277
      %p284 = scmp.eq.s32.totalorder %s36, 1
      %p285 = por %p283, %p284
      %p286 = scmp.ne.s32.totalorder %s277, %s278
      %p287 = scmp.eq.s32.totalorder %s36, 0
      %p288 = por %p286, %p287
      %p289 = scmp.ne.s32.totalorder %s277, %s278
      %p290 = scmp.eq.s32.totalorder %s37, 1
      %p291 = por %p289, %p290
      %p293 = scmp.ne.s32.totalorder %s278, %s292
      %p294 = scmp.eq.s32.totalorder %s37, 0
      %p295 = por %p293, %p294
      %s297 = sadd.s32 %s296, 1
      %p300 = scmp.eq.s32.totalorder %s31, 1
      %p301 = scmp.ne.s32.totalorder %s296, %s298
      %p302 = scmp.eq.s32.totalorder %s31, 0
      %p303 = por %p301, %p302
      %p304 = scmp.ne.s32.totalorder %s296, %s298
      %p305 = scmp.eq.s32.totalorder %s36, 1
      %p306 = por %p304, %p305
      %p307 = scmp.ne.s32.totalorder %s298, %s299
      %p308 = scmp.eq.s32.totalorder %s36, 0
      %p309 = por %p307, %p308
      %p310 = scmp.ne.s32.totalorder %s298, %s299
      %p311 = scmp.eq.s32.totalorder %s37, 1
      %p312 = por %p310, %p311
      %p314 = scmp.ne.s32.totalorder %s299, %s313
      %p315 = scmp.eq.s32.totalorder %s37, 0
      %p316 = por %p314, %p315
      %s317 = ssub.s32 %s31, %s38
      %p318 = scmp.eq.s32.totalorder %s317, 0
      %s320 = sadd.s32 %s319, 1
      %s321 = scalar_select %p318, %s319, %s320
      %p324 = pneg %p318
      %p325 = scmp.eq.s32.totalorder %s31, 1
      %p326 = por %p324, %p325
      %p327 = scmp.ne.s32.totalorder %s319, %s322
      %p328 = scmp.eq.s32.totalorder %s31, 0
      %p329 = por %p327, %p328
      %p330 = scmp.ne.s32.totalorder %s319, %s322
      %p331 = scmp.eq.s32.totalorder %s36, 1
      %p332 = por %p330, %p331
      %p333 = scmp.ne.s32.totalorder %s322, %s323
      %p334 = scmp.eq.s32.totalorder %s36, 0
      %p335 = por %p333, %p334
      %p336 = scmp.ne.s32.totalorder %s322, %s323
      %p337 = scmp.eq.s32.totalorder %s37, 1
      %p338 = por %p336, %p337
      %p340 = scmp.ne.s32.totalorder %s323, %s339
      %p341 = scmp.eq.s32.totalorder %s37, 0
      %p342 = por %p340, %p341
      %p343 = scmp.le.s32.totalorder 1, %s31
      %p344 = scmp.lt.s32.totalorder %s31, 3
      %p345 = pnand %p343, %p344
      %p346 = pneg %p345
      // Predicated region
      $region9: #{tpu_custom_call.1} parent=5 // pred_check
        _
      $region10: #{tpu_custom_call.1} parent=5 // pred_check_branch
        %348 = sbr.rel (%p345) target = $region12
      $region11: #{tpu_custom_call.1} parent=5 // pred_region
        %s349 = ssub.s32 %s31, 1
        // Predicated region
        $region13: #{tpu_custom_call.1} parent=11 // pred_check
          %p350 = pneg %p78
        $region14: #{tpu_custom_call.1} parent=11 // pred_check_branch
          %352 = sbr.rel (%p350) target = $region16
        $region15: #{tpu_custom_call.1} parent=11 // pred_region
          %s354 = ssub.s32 16, 16
          %355 = vsyncadd [#allocation7], %s354
          %s357 = sshll.u32 [#allocation6], 4
          %s358 = int_to_ptr.vmem [resolvable:$true] %s357
          %360 = dma.hbm_to_vmem [thread:$0]  %s1, 16, %s358, [#allocation7]
        $region16: #{tpu_custom_call.1} parent=11 // pred_fallthru
          _
        // Predicated region
        $region17: #{tpu_custom_call.1} parent=11 // pred_check
          %p361 = pneg %p99
        $region18: #{tpu_custom_call.1} parent=11 // pred_check_branch
          %363 = sbr.rel (%p361) target = $region20
        $region19: #{tpu_custom_call.1} parent=11 // pred_region
          %s365 = ssub.s32 16, 16
          %366 = vsyncadd [#allocation7], %s365
          %s368 = sshll.u32 [#allocation8], 4
          %s369 = int_to_ptr.vmem [resolvable:$true] %s368
          %371 = dma.hbm_to_vmem [thread:$0]  %s2, 16, %s369, [#allocation7]
        $region20: #{tpu_custom_call.1} parent=11 // pred_fallthru
          _
        // Predicated region
        $region21: #{tpu_custom_call.1} parent=11 // pred_check
          %p372 = pneg %p120
        $region22: #{tpu_custom_call.1} parent=11 // pred_check_branch
          %374 = sbr.rel (%p372) target = $region24
        $region23: #{tpu_custom_call.1} parent=11 // pred_region
          %s376 = ssub.s32 3072, 3072
          %377 = vsyncadd [#allocation10], %s376
          %s378 = sshll.u32 [#allocation9], 4
          %s379 = int_to_ptr.vmem [resolvable:$true] %s378
          %384 = dma.hbm_to_vmem [thread:$0]  %s3, 3072, %s379, [#allocation10], 192, 192, 12
        $region24: #{tpu_custom_call.1} parent=11 // pred_fallthru
          _
        // Predicated region
        $region25: #{tpu_custom_call.1} parent=11 // pred_check
          %p385 = pneg %p141
        $region26: #{tpu_custom_call.1} parent=11 // pred_check_branch
          %387 = sbr.rel (%p385) target = $region28
        $region27: #{tpu_custom_call.1} parent=11 // pred_region
          %s389 = ssub.s32 48, 48
          %390 = vsyncadd [#allocation10], %s389
          %s392 = sshll.u32 [#allocation11], 4
          %s393 = int_to_ptr.vmem [resolvable:$true] %s392
          %395 = dma.hbm_to_vmem [thread:$0]  %s4, 48, %s393, [#allocation10]
        $region28: #{tpu_custom_call.1} parent=11 // pred_fallthru
          _
        // Predicated region
        $region29: #{tpu_custom_call.1} parent=11 // pred_check
          %p396 = pneg %p162
        $region30: #{tpu_custom_call.1} parent=11 // pred_check_branch
          %398 = sbr.rel (%p396) target = $region32
        $region31: #{tpu_custom_call.1} parent=11 // pred_region
          %s400 = ssub.s32 1024, 1024
          %401 = vsyncadd [#allocation13], %s400
          %s402 = sshll.u32 [#allocation12], 4
          %s403 = int_to_ptr.vmem [resolvable:$true] %s402
          %408 = dma.hbm_to_vmem [thread:$0]  %s5, 1024, %s403, [#allocation13], 64, 64, 4
        $region32: #{tpu_custom_call.1} parent=11 // pred_fallthru
          _
        // Predicated region
        $region33: #{tpu_custom_call.1} parent=11 // pred_check
          %p409 = pneg %p183
        $region34: #{tpu_custom_call.1} parent=11 // pred_check_branch
          %411 = sbr.rel (%p409) target = $region36
        $region35: #{tpu_custom_call.1} parent=11 // pred_region
          %s413 = ssub.s32 16, 16
          %414 = vsyncadd [#allocation13], %s413
          %s416 = sshll.u32 [#allocation14], 4
          %s417 = int_to_ptr.vmem [resolvable:$true] %s416
          %419 = dma.hbm_to_vmem [thread:$0]  %s6, 16, %s417, [#allocation13]
        $region36: #{tpu_custom_call.1} parent=11 // pred_fallthru
          _
        // Predicated region
        $region37: #{tpu_custom_call.1} parent=11 // pred_check
          %p420 = pneg %p204
        $region38: #{tpu_custom_call.1} parent=11 // pred_check_branch
          %422 = sbr.rel (%p420) target = $region40
        $region39: #{tpu_custom_call.1} parent=11 // pred_region
          %s424 = ssub.s32 16, 16
          %425 = vsyncadd [#allocation16], %s424
          %s427 = sshll.u32 [#allocation15], 4
          %s428 = int_to_ptr.vmem [resolvable:$true] %s427
          %430 = dma.hbm_to_vmem [thread:$0]  %s7, 16, %s428, [#allocation16]
        $region40: #{tpu_custom_call.1} parent=11 // pred_fallthru
          _
        // Predicated region
        $region41: #{tpu_custom_call.1} parent=11 // pred_check
          %p431 = pneg %p225
        $region42: #{tpu_custom_call.1} parent=11 // pred_check_branch
          %433 = sbr.rel (%p431) target = $region44
        $region43: #{tpu_custom_call.1} parent=11 // pred_region
          %s435 = ssub.s32 16, 16
          %436 = vsyncadd [#allocation16], %s435
          %s438 = sshll.u32 [#allocation17], 4
          %s439 = int_to_ptr.vmem [resolvable:$true] %s438
          %441 = dma.hbm_to_vmem [thread:$0]  %s8, 16, %s439, [#allocation16]
        $region44: #{tpu_custom_call.1} parent=11 // pred_fallthru
          _
        // Predicated region
        $region45: #{tpu_custom_call.1} parent=11 // pred_check
          %p442 = pneg %p246
        $region46: #{tpu_custom_call.1} parent=11 // pred_check_branch
          %444 = sbr.rel (%p442) target = $region48
        $region47: #{tpu_custom_call.1} parent=11 // pred_region
          %s446 = ssub.s32 2048, 2048
          %447 = vsyncadd [#allocation19], %s446
          %s448 = sshll.u32 [#allocation18], 4
          %s449 = int_to_ptr.vmem [resolvable:$true] %s448
          %454 = dma.hbm_to_vmem [thread:$0]  %s9, 2048, %s449, [#allocation19], 128, 128, 8
        $region48: #{tpu_custom_call.1} parent=11 // pred_fallthru
          _
        // Predicated region
        $region49: #{tpu_custom_call.1} parent=11 // pred_check
          %p455 = pneg %p267
        $region50: #{tpu_custom_call.1} parent=11 // pred_check_branch
          %457 = sbr.rel (%p455) target = $region52
        $region51: #{tpu_custom_call.1} parent=11 // pred_region
          %s459 = ssub.s32 32, 32
          %460 = vsyncadd [#allocation19], %s459
          %s462 = sshll.u32 [#allocation20], 4
          %s463 = int_to_ptr.vmem [resolvable:$true] %s462
          %465 = dma.hbm_to_vmem [thread:$0]  %s10, 32, %s463, [#allocation19]
        $region52: #{tpu_custom_call.1} parent=11 // pred_fallthru
          _
        // Predicated region
        $region53: #{tpu_custom_call.1} parent=11 // pred_check
          %p466 = pneg %p288
        $region54: #{tpu_custom_call.1} parent=11 // pred_check_branch
          %468 = sbr.rel (%p466) target = $region56
        $region55: #{tpu_custom_call.1} parent=11 // pred_region
          %s470 = ssub.s32 2048, 2048
          %471 = vsyncadd [#allocation22], %s470
          %s472 = sshll.u32 [#allocation21], 4
          %s473 = int_to_ptr.vmem [resolvable:$true] %s472
          %478 = dma.hbm_to_vmem [thread:$0]  %s11, 2048, %s473, [#allocation22], 64, 64, 4
        $region56: #{tpu_custom_call.1} parent=11 // pred_fallthru
          _
        // Predicated region
        $region57: #{tpu_custom_call.1} parent=11 // pred_check
          %p479 = pneg %p309
        $region58: #{tpu_custom_call.1} parent=11 // pred_check_branch
          %481 = sbr.rel (%p479) target = $region60
        $region59: #{tpu_custom_call.1} parent=11 // pred_region
          %s483 = ssub.s32 16, 16
          %484 = vsyncadd [#allocation22], %s483
          %s486 = sshll.u32 [#allocation23], 4
          %s487 = int_to_ptr.vmem [resolvable:$true] %s486
          %489 = dma.hbm_to_vmem [thread:$0]  %s12, 16, %s487, [#allocation22]
        $region60: #{tpu_custom_call.1} parent=11 // pred_fallthru
          _
      $region12: #{tpu_custom_call.1} parent=5 // pred_fallthru
        _
      %p490 = scmp.lt.s32.totalorder %s31, 2
      // Predicated region
      $region61: #{tpu_custom_call.1} parent=5 // pred_check
        %p491 = pneg %p490
      $region62: #{tpu_custom_call.1} parent=5 // pred_check_branch
        %493 = sbr.rel (%p491) target = $region64
      $region63: #{tpu_custom_call.1} parent=5 // pred_region
        // Predicated region
        $region65: #{tpu_custom_call.1} parent=63 // pred_check
          %p494 = pneg %p51
        $region66: #{tpu_custom_call.1} parent=63 // pred_check_branch
          %496 = sbr.rel (%p494) target = $region68
        $region67: #{tpu_custom_call.1} parent=63 // pred_region
          %s497 = sand.u32 %s41, 1
          %s498 = scalar_lea.sflag [#allocation4], %s497
          %s499 = sand.u32 %s41, 1
          %s500 = smul.addr %s499, 16
          %s501 = scalar_lea.vmem [#allocation3], %s500
          %s503 = ssub.s32 256, 256
          %504 = vsyncadd %s498, %s503
          %s505 = smul.addr %s31, 2
          %s506 = smul.addr %s505, 128
          %s507 = scalar_lea.hbm %s0, %s506
          %s508 = sshll.u32 %s501, 4
          %s509 = int_to_ptr.vmem [resolvable:$true] %s508
          %514 = dma.hbm_to_vmem [thread:$0]  %s507, 256, %s509, %s498, 128, 128, 8
        $region68: #{tpu_custom_call.1} parent=63 // pred_fallthru
          _
      $region64: #{tpu_custom_call.1} parent=5 // pred_fallthru
        _
      %p515 = scmp.le.s32.totalorder 1, %s31
      %p516 = scmp.lt.s32.totalorder %s31, 3
      %p517 = pnand %p515, %p516
      %p518 = pneg %p517
      // Predicated region
      $region69: #{tpu_custom_call.1} parent=5 // pred_check
        _
      $region70: #{tpu_custom_call.1} parent=5 // pred_check_branch
        %520 = sbr.rel (%p517) target = $region72
      $region71: #{tpu_custom_call.1} parent=5 // pred_region
        %s521 = ssub.s32 %s31, 1
        %s522 = sand.u32 %s44, 1
        %s523 = scalar_lea.sflag [#allocation4], %s522
        %s524 = sand.u32 %s44, 1
        %s525 = smul.addr %s524, 16
        %s526 = scalar_lea.vmem [#allocation3], %s525
        // Predicated region
        $region73: #{tpu_custom_call.1} parent=71 // pred_check
          %p527 = pneg %p57
        $region74: #{tpu_custom_call.1} parent=71 // pred_check_branch
          %529 = sbr.rel (%p527) target = $region76
        $region75: #{tpu_custom_call.1} parent=71 // pred_region
          %530 = dma.done %s523, 256
        $region76: #{tpu_custom_call.1} parent=71 // pred_fallthru
          _
        // Predicated region
        $region77: #{tpu_custom_call.1} parent=71 // pred_check
          %p531 = pneg %p78
        $region78: #{tpu_custom_call.1} parent=71 // pred_check_branch
          %533 = sbr.rel (%p531) target = $region80
        $region79: #{tpu_custom_call.1} parent=71 // pred_region
          %534 = dma.done [#allocation7], 16
        $region80: #{tpu_custom_call.1} parent=71 // pred_fallthru
          _
        // Predicated region
        $region81: #{tpu_custom_call.1} parent=71 // pred_check
          %p535 = pneg %p99
        $region82: #{tpu_custom_call.1} parent=71 // pred_check_branch
          %537 = sbr.rel (%p535) target = $region84
        $region83: #{tpu_custom_call.1} parent=71 // pred_region
          %538 = dma.done [#allocation7], 16
        $region84: #{tpu_custom_call.1} parent=71 // pred_fallthru
          _
        // Predicated region
        $region85: #{tpu_custom_call.1} parent=71 // pred_check
          %p539 = pneg %p120
        $region86: #{tpu_custom_call.1} parent=71 // pred_check_branch
          %541 = sbr.rel (%p539) target = $region88
        $region87: #{tpu_custom_call.1} parent=71 // pred_region
          %542 = dma.done [#allocation10], 3072
        $region88: #{tpu_custom_call.1} parent=71 // pred_fallthru
          _
        // Predicated region
        $region89: #{tpu_custom_call.1} parent=71 // pred_check
          %p543 = pneg %p141
        $region90: #{tpu_custom_call.1} parent=71 // pred_check_branch
          %545 = sbr.rel (%p543) target = $region92
        $region91: #{tpu_custom_call.1} parent=71 // pred_region
          %546 = dma.done [#allocation10], 48
        $region92: #{tpu_custom_call.1} parent=71 // pred_fallthru
          _
        // Predicated region
        $region93: #{tpu_custom_call.1} parent=71 // pred_check
          %p547 = pneg %p162
        $region94: #{tpu_custom_call.1} parent=71 // pred_check_branch
          %549 = sbr.rel (%p547) target = $region96
        $region95: #{tpu_custom_call.1} parent=71 // pred_region
          %550 = dma.done [#allocation13], 1024
        $region96: #{tpu_custom_call.1} parent=71 // pred_fallthru
          _
        // Predicated region
        $region97: #{tpu_custom_call.1} parent=71 // pred_check
          %p551 = pneg %p183
        $region98: #{tpu_custom_call.1} parent=71 // pred_check_branch
          %553 = sbr.rel (%p551) target = $region100
        $region99: #{tpu_custom_call.1} parent=71 // pred_region
          %554 = dma.done [#allocation13], 16
        $region100: #{tpu_custom_call.1} parent=71 // pred_fallthru
          _
        // Predicated region
        $region101: #{tpu_custom_call.1} parent=71 // pred_check
          %p555 = pneg %p204
        $region102: #{tpu_custom_call.1} parent=71 // pred_check_branch
          %557 = sbr.rel (%p555) target = $region104
        $region103: #{tpu_custom_call.1} parent=71 // pred_region
          %558 = dma.done [#allocation16], 16
        $region104: #{tpu_custom_call.1} parent=71 // pred_fallthru
          _
        // Predicated region
        $region105: #{tpu_custom_call.1} parent=71 // pred_check
          %p559 = pneg %p225
        $region106: #{tpu_custom_call.1} parent=71 // pred_check_branch
          %561 = sbr.rel (%p559) target = $region108
        $region107: #{tpu_custom_call.1} parent=71 // pred_region
          %562 = dma.done [#allocation16], 16
        $region108: #{tpu_custom_call.1} parent=71 // pred_fallthru
          _
        // Predicated region
        $region109: #{tpu_custom_call.1} parent=71 // pred_check
          %p563 = pneg %p246
        $region110: #{tpu_custom_call.1} parent=71 // pred_check_branch
          %565 = sbr.rel (%p563) target = $region112
        $region111: #{tpu_custom_call.1} parent=71 // pred_region
          %566 = dma.done [#allocation19], 2048
        $region112: #{tpu_custom_call.1} parent=71 // pred_fallthru
          _
        // Predicated region
        $region113: #{tpu_custom_call.1} parent=71 // pred_check
          %p567 = pneg %p267
        $region114: #{tpu_custom_call.1} parent=71 // pred_check_branch
          %569 = sbr.rel (%p567) target = $region116
        $region115: #{tpu_custom_call.1} parent=71 // pred_region
          %570 = dma.done [#allocation19], 32
        $region116: #{tpu_custom_call.1} parent=71 // pred_fallthru
          _
        // Predicated region
        $region117: #{tpu_custom_call.1} parent=71 // pred_check
          %p571 = pneg %p288
        $region118: #{tpu_custom_call.1} parent=71 // pred_check_branch
          %573 = sbr.rel (%p571) target = $region120
        $region119: #{tpu_custom_call.1} parent=71 // pred_region
          %574 = dma.done [#allocation22], 2048
        $region120: #{tpu_custom_call.1} parent=71 // pred_fallthru
          _
        // Predicated region
        $region121: #{tpu_custom_call.1} parent=71 // pred_check
          %p575 = pneg %p309
        $region122: #{tpu_custom_call.1} parent=71 // pred_check_branch
          %577 = sbr.rel (%p575) target = $region124
        $region123: #{tpu_custom_call.1} parent=71 // pred_region
          %578 = dma.done [#allocation22], 16
        $region124: #{tpu_custom_call.1} parent=71 // pred_fallthru
          _
        %s579 = sand.u32 %s44, 1
        %s580 = scalar_lea.sflag [#allocation4], %s579
        %s581 = sand.u32 %s44, 1
        %s582 = smul.addr %s581, 16
        %s583 = scalar_lea.vmem [#allocation3], %s582
        %p584 = pneg %p57
        %p585 = pneg %p54
        %p586 = pneg %p78
        %p587 = pneg %p75
        %p588 = pneg %p99
        %p589 = pneg %p96
        %p590 = pneg %p120
        %p591 = pneg %p117
        %p592 = pneg %p141
        %p593 = pneg %p138
        %p594 = pneg %p162
        %p595 = pneg %p159
        %p596 = pneg %p183
        %p597 = pneg %p180
        %p598 = pneg %p204
        %p599 = pneg %p201
        %p600 = pneg %p225
        %p601 = pneg %p222
        %p602 = pneg %p246
        %p603 = pneg %p243
        %p604 = pneg %p267
        %p605 = pneg %p264
        %p606 = pneg %p288
        %p607 = pneg %p285
        %p608 = pneg %p309
        %p609 = pneg %p306
        %p610 = pneg %p335
        %p611 = pneg %p332
        %s612 = sand.u32 %s322, 1
        %s613 = scalar_lea.sflag [#allocation5], %s612
        %s614 = sand.u32 %s322, 1
        %s615 = smul.addr %s614, 16
        %s616 = scalar_lea.vmem [#allocation24], %s615
        %v618 = vld [vmem:[%s526] sm:$0xff]
        %v619 = vld [vmem:[%s526 + $0x8] sm:$0xff]
        %v620 = vld [vmem:[#allocation6] sm:$0x1]
        %v621 = vld [vmem:[#allocation8] sm:$0x1]
        %622 = vadd.xlane.f32.xlu0 %v618
        %v623 = vpop.xlane.xlu0 %622
        %624 = vadd.xlane.f32.xlu0 %v619
        %v625 = vpop.xlane.xlu0 %624
        %v626 = vrcp.pop 128.0
        %v627 = vmul.f32 %v623, %v626
        %v628 = vmul.f32 %v625, %v626
        %v629 = vsub.f32 %v618, %v627
        %v630 = vsub.f32 %v619, %v628
        %v631 = vmul.f32 %v629, %v629
        %v632 = vmul.f32 %v630, %v630
        %633 = vadd.xlane.f32.xlu0 %v631
        %v634 = vpop.xlane.xlu0 %633
        %635 = vadd.xlane.f32.xlu0 %v632
        %v636 = vpop.xlane.xlu0 %635
        %v637 = vrcp.pop 127.0
        %v638 = vmul.f32 %v634, %v637
        %v639 = vmul.f32 %v636, %v637
        %v640 = vrsqrt.pop %v638
        %v641 = vmul.f32 %v638, %v640
        %vm642 = vcmp.eq.f32.partialorder %v638, inf
        %v643 = vsel %vm642, %v638, %v641
        %vm644 = vcmp.eq.f32.partialorder %v638, 0.0
        %v645 = vand.u32 %v638, 2147483648
        %v646 = vsel %vm644, %v645, %v643
        %v647 = vrsqrt.pop %v639
        %v648 = vmul.f32 %v639, %v647
        %vm649 = vcmp.eq.f32.partialorder %v639, inf
        %v650 = vsel %vm649, %v639, %v648
        %vm651 = vcmp.eq.f32.partialorder %v639, 0.0
        %v652 = vand.u32 %v639, 2147483648
        %v653 = vsel %vm651, %v652, %v650
        %v654 = vadd.f32 %v646, 1e-06
        %v655 = vadd.f32 %v653, 1e-06
        %v656 = vrcp.pop %v654
        %v657 = vrcp.pop %v655
        %v658 = vmul.f32 %v629, %v656
        %v659 = vmul.f32 %v630, %v657
        %v661 = vlaneseq
        %v662 = vshrl.u32 %v661, 7
        %v663 = vsub.s32 0, %v662
        %v664 = vrot.slane %v620, %v663
        %v666 = vmul.f32 %v658, %v664
        %v667 = vmul.f32 %v659, %v664
        %v669 = vlaneseq
        %v670 = vshrl.u32 %v669, 7
        %v671 = vsub.s32 0, %v670
        %v672 = vrot.slane %v621, %v671
        %v674 = vadd.f32 %v666, %v672
        %v675 = vadd.f32 %v667, %v672
        %v676 = vpack.c.bf16 %v675, %v674
        %v677 = vld [vmem:[#allocation9] sm:$0xff]
        %v678 = vld [vmem:[#allocation9 + $0x8] sm:$0xf]
        %v679 = vld [vmem:[#allocation9 + $0xc] sm:$0xff]
        %v680 = vld [vmem:[#allocation9 + $0x14] sm:$0xf]
        %v681 = vld [vmem:[#allocation9 + $0x18] sm:$0xff]
        %v682 = vld [vmem:[#allocation9 + $0x20] sm:$0xf]
        %v683 = vld [vmem:[#allocation9 + $0x24] sm:$0xff]
        %v684 = vld [vmem:[#allocation9 + $0x2c] sm:$0xf]
        %v685 = vld [vmem:[#allocation9 + $0x30] sm:$0xff]
        %v686 = vld [vmem:[#allocation9 + $0x38] sm:$0xf]
        %v687 = vld [vmem:[#allocation9 + $0x3c] sm:$0xff]
        %v688 = vld [vmem:[#allocation9 + $0x44] sm:$0xf]
        %v689 = vld [vmem:[#allocation9 + $0x48] sm:$0xff]
        %v690 = vld [vmem:[#allocation9 + $0x50] sm:$0xf]
        %v691 = vld [vmem:[#allocation9 + $0x54] sm:$0xff]
        %v692 = vld [vmem:[#allocation9 + $0x5c] sm:$0xf]
        %v693 = vld [vmem:[#allocation9 + $0x60] sm:$0xff]
        %v694 = vld [vmem:[#allocation9 + $0x68] sm:$0xf]
        %v695 = vld [vmem:[#allocation9 + $0x6c] sm:$0xff]
        %v696 = vld [vmem:[#allocation9 + $0x74] sm:$0xf]
        %v697 = vld [vmem:[#allocation9 + $0x78] sm:$0xff]
        %v698 = vld [vmem:[#allocation9 + $0x80] sm:$0xf]
        %v699 = vld [vmem:[#allocation9 + $0x84] sm:$0xff]
        %v700 = vld [vmem:[#allocation9 + $0x8c] sm:$0xf]
        %v701 = vld [vmem:[#allocation9 + $0x90] sm:$0xff]
        %v702 = vld [vmem:[#allocation9 + $0x98] sm:$0xf]
        %v703 = vld [vmem:[#allocation9 + $0x9c] sm:$0xff]
        %v704 = vld [vmem:[#allocation9 + $0xa4] sm:$0xf]
        %v705 = vld [vmem:[#allocation9 + $0xa8] sm:$0xff]
        %v706 = vld [vmem:[#allocation9 + $0xb0] sm:$0xf]
        %v707 = vld [vmem:[#allocation9 + $0xb4] sm:$0xff]
        %v708 = vld [vmem:[#allocation9 + $0xbc] sm:$0xf]
        %v709 = vld [vmem:[#allocation11] sm:$0x7]
        %v711 = vlaneseq
        %v712 = vshrl.u32 %v711, 7
        %v713 = vsub.s32 0, %v712
        %v714 = vrot.slane %v709, %v713
        %v715 = vlaneseq
        %v716 = vshrl.u32 %v715, 7
        %v717 = vsub.s32 1, %v716
        %v718 = vrot.slane %v709, %v717
        %v719 = vlaneseq
        %v720 = vshrl.u32 %v719, 7
        %v721 = vsub.s32 2, %v720
        %v722 = vrot.slane %v709, %v721
        %v758 = vunpack.c.l.b16 %v677
        %v759 = vunpack.c.h.b16 %v677
        %v760 = vunpack.c.l.b16 %v678
        %v761 = vunpack.c.l.b16 %v679
        %v762 = vunpack.c.h.b16 %v679
        %v763 = vunpack.c.l.b16 %v680
        %v764 = vunpack.c.l.b16 %v681
        %v765 = vunpack.c.h.b16 %v681
        %v766 = vunpack.c.l.b16 %v682
        %v767 = vunpack.c.l.b16 %v683
        %v768 = vunpack.c.h.b16 %v683
        %v769 = vunpack.c.l.b16 %v684
        %v770 = vunpack.c.l.b16 %v685
        %v771 = vunpack.c.h.b16 %v685
        %v772 = vunpack.c.l.b16 %v686
        %v773 = vunpack.c.l.b16 %v687
        %v774 = vunpack.c.h.b16 %v687
        %v775 = vunpack.c.l.b16 %v688
        %v776 = vunpack.c.l.b16 %v689
        %v777 = vunpack.c.h.b16 %v689
        %v778 = vunpack.c.l.b16 %v690
        %v779 = vunpack.c.l.b16 %v691
        %v780 = vunpack.c.h.b16 %v691
        %v781 = vunpack.c.l.b16 %v692
        %v782 = vunpack.c.l.b16 %v693
        %v783 = vunpack.c.h.b16 %v693
        %v784 = vunpack.c.l.b16 %v694
        %v785 = vunpack.c.l.b16 %v695
        %v786 = vunpack.c.h.b16 %v695
        %v787 = vunpack.c.l.b16 %v696
        %v788 = vunpack.c.l.b16 %v697
        %v789 = vunpack.c.h.b16 %v697
        %v790 = vunpack.c.l.b16 %v698
        %v791 = vunpack.c.l.b16 %v699
        %v792 = vunpack.c.h.b16 %v699
        %v793 = vunpack.c.l.b16 %v700
        %v794 = vunpack.c.l.b16 %v701
        %v795 = vunpack.c.h.b16 %v701
        %v796 = vunpack.c.l.b16 %v702
        %v797 = vunpack.c.l.b16 %v703
        %v798 = vunpack.c.h.b16 %v703
        %v799 = vunpack.c.l.b16 %v704
        %v800 = vunpack.c.l.b16 %v705
        %v801 = vunpack.c.h.b16 %v705
        %v802 = vunpack.c.l.b16 %v706
        %v803 = vunpack.c.l.b16 %v707
        %v804 = vunpack.c.h.b16 %v707
        %v805 = vunpack.c.l.b16 %v708
        %v806 = vpack.c.b16 %v761, %v758
        %v807 = vpack.c.b16 %v762, %v759
        %v808 = vpack.c.b16 %v763, %v760
        %v809 = vpack.c.b16 %v767, %v764
        %v810 = vpack.c.b16 %v768, %v765
        %v811 = vpack.c.b16 %v769, %v766
        %v812 = vpack.c.b16 %v773, %v770
        %v813 = vpack.c.b16 %v774, %v771
        %v814 = vpack.c.b16 %v775, %v772
        %v815 = vpack.c.b16 %v779, %v776
        %v816 = vpack.c.b16 %v780, %v777
        %v817 = vpack.c.b16 %v781, %v778
        %v818 = vpack.c.b16 %v785, %v782
        %v819 = vpack.c.b16 %v786, %v783
        %v820 = vpack.c.b16 %v787, %v784
        %v821 = vpack.c.b16 %v791, %v788
        %v822 = vpack.c.b16 %v792, %v789
        %v823 = vpack.c.b16 %v793, %v790
        %v824 = vpack.c.b16 %v797, %v794
        %v825 = vpack.c.b16 %v798, %v795
        %v826 = vpack.c.b16 %v799, %v796
        %v827 = vpack.c.b16 %v803, %v800
        %v828 = vpack.c.b16 %v804, %v801
        %v829 = vpack.c.b16 %v805, %v802
        %854 = vmatprep.subr.bf16.mxu0 %v807
        %855 = vmatpush1.bf16.msra.mxu0 %v806
        %856 = vmatprep.subr.bf16.mxu0 %v810
        %857 = vmatpush1.bf16.msra.mxu0 %v809
        %858 = vmatprep.subr.bf16.mxu0 %v813
        %859 = vmatpush1.bf16.msra.mxu0 %v812
        %860 = vmatprep.subr.bf16.mxu0 %v816
        %861 = vmatpush1.bf16.msra.mxu0 %v815
        %862 = vmatprep.subr.bf16.mxu0 %v819
        %863 = vmatpush1.bf16.msra.mxu0 %v818
        %864 = vmatprep.subr.bf16.mxu0 %v822
        %865 = vmatpush1.bf16.msra.mxu0 %v821
        %866 = vmatprep.subr.bf16.mxu0 %v825
        %867 = vmatpush1.bf16.msra.mxu0 %v824
        %868 = vmatprep.subr.bf16.mxu0 %v828
        %869 = vmatpush1.bf16.msra.mxu0 %v827
        %870 = vmatprep.subr.bf16.mxu0 0
        %871 = vmatpush1.bf16.msra.mxu0 0
        %872 = vmatprep.subr.bf16.mxu0 0
        %873 = vmatpush1.bf16.msra.mxu0 0
        %874 = vmatprep.subr.bf16.mxu0 0
        %875 = vmatpush1.bf16.msra.mxu0 0
        %876 = vmatprep.subr.bf16.mxu0 0
        %877 = vmatpush1.bf16.msra.mxu0 0
        %878 = vmatprep.subr.bf16.mxu0 0
        %879 = vmatpush1.bf16.msra.mxu0 0
        %880 = vmatprep.subr.bf16.mxu0 0
        %881 = vmatpush1.bf16.msra.mxu0 0
        %882 = vmatprep.subr.bf16.mxu0 0
        %883 = vmatpush1.bf16.msra.mxu0 0
        %884 = vmatprep.subr.bf16.mxu0 0
        %885 = vmatpush1.bf16.msra.mxu0 0
        %886 = vmatprep.mubr.bf16.mxu0 0
        %887 = vmatmul.mubr.bf16.gmra.mrb[0].mxu0 %v676
        %v888 = vpop.f32.mrb[0].mxu0
        %v889 = vadd.f32 %v714, %v888
        %v890 = vpop.f32.mrb[0].mxu0
        %v891 = vadd.f32 %v718, %v890
        %v892 = vpop.f32.mrb[0].mxu0
        %v893 = vadd.f32 %v714, %v892
        %v894 = vpop.f32.mrb[0].mxu0
        %v895 = vadd.f32 %v718, %v894
        %896 = vdwg.mxu0
        %897 = vmatprep.subr.bf16.mxu0 0
        %898 = vmatpush1.bf16.msra.mxu0 %v808
        %899 = vmatprep.subr.bf16.mxu0 0
        %900 = vmatpush1.bf16.msra.mxu0 %v811
        %901 = vmatprep.subr.bf16.mxu0 0
        %902 = vmatpush1.bf16.msra.mxu0 %v814
        %903 = vmatprep.subr.bf16.mxu0 0
        %904 = vmatpush1.bf16.msra.mxu0 %v817
        %905 = vmatprep.subr.bf16.mxu0 0
        %906 = vmatpush1.bf16.msra.mxu0 %v820
        %907 = vmatprep.subr.bf16.mxu0 0
        %908 = vmatpush1.bf16.msra.mxu0 %v823
        %909 = vmatprep.subr.bf16.mxu0 0
        %910 = vmatpush1.bf16.msra.mxu0 %v826
        %911 = vmatprep.subr.bf16.mxu0 0
        %912 = vmatpush1.bf16.msra.mxu0 %v829
        %913 = vmatprep.subr.bf16.mxu0 0
        %914 = vmatpush1.bf16.msra.mxu0 0
        %915 = vmatprep.subr.bf16.mxu0 0
        %916 = vmatpush1.bf16.msra.mxu0 0
        %917 = vmatprep.subr.bf16.mxu0 0
        %918 = vmatpush1.bf16.msra.mxu0 0
        %919 = vmatprep.subr.bf16.mxu0 0
        %920 = vmatpush1.bf16.msra.mxu0 0
        %921 = vmatprep.subr.bf16.mxu0 0
        %922 = vmatpush1.bf16.msra.mxu0 0
        %923 = vmatprep.subr.bf16.mxu0 0
        %924 = vmatpush1.bf16.msra.mxu0 0
        %925 = vmatprep.subr.bf16.mxu0 0
        %926 = vmatpush1.bf16.msra.mxu0 0
        %927 = vmatprep.subr.bf16.mxu0 0
        %928 = vmatpush1.bf16.msra.mxu0 0
        %929 = vmatprep.mubr.bf16.mxu0 0
        %930 = vmatmul.mubr.bf16.gmra.mrb[0].mxu0 %v676
        %v931 = vpop.f32.mrb[0].mxu0
        %v932 = vadd.f32 %v722, %v931
        %v933 = vpop.f32.mrb[0].mxu0
        %v934 = vpop.f32.mrb[0].mxu0
        %v935 = vadd.f32 %v722, %v934
        %v936 = vpop.f32.mrb[0].mxu0
        %937 = vdwg.mxu0
        %v938 = vpack.c.bf16 %v893, %v889
        %v939 = vpack.c.bf16 %v895, %v891
        %vm940 = vcmask 261120
        %v942 = vsel %vm940, %v938, 0
        %v945 = vsel %vm940, %v939, 0
        %947 = vmatprep.subr.bf16.mxu0 0
        %948 = vmatpush1.bf16.xpose.msra.mxu0 %v945
        %949 = vmatprep.subr.bf16.mxu0 0
        %950 = vmatpush1.bf16.xpose.msra.mxu0 0
        %951 = vmatprep.subr.bf16.mxu0 0
        %952 = vmatpush1.bf16.xpose.msra.mxu0 0
        %953 = vmatprep.subr.bf16.mxu0 0
        %954 = vmatpush1.bf16.xpose.msra.mxu0 0
        %955 = vmatprep.subr.bf16.mxu0 0
        %956 = vmatpush1.bf16.xpose.msra.mxu0 0
        %957 = vmatprep.subr.bf16.mxu0 0
        %958 = vmatpush1.bf16.xpose.msra.mxu0 0
        %959 = vmatprep.subr.bf16.mxu0 0
        %960 = vmatpush1.bf16.xpose.msra.mxu0 0
        %961 = vmatprep.subr.bf16.mxu0 0
        %962 = vmatpush1.bf16.xpose.msra.mxu0 0
        %963 = vmatprep.subr.bf16.mxu0 0
        %964 = vmatpush1.bf16.xpose.msra.mxu0 0
        %965 = vmatprep.subr.bf16.mxu0 0
        %966 = vmatpush1.bf16.xpose.msra.mxu0 0
        %967 = vmatprep.subr.bf16.mxu0 0
        %968 = vmatpush1.bf16.xpose.msra.mxu0 0
        %969 = vmatprep.subr.bf16.mxu0 0
        %970 = vmatpush1.bf16.xpose.msra.mxu0 0
        %971 = vmatprep.subr.bf16.mxu0 0
        %972 = vmatpush1.bf16.xpose.msra.mxu0 0
        %973 = vmatprep.subr.bf16.mxu0 0
        %974 = vmatpush1.bf16.xpose.msra.mxu0 0
        %975 = vmatprep.subr.bf16.mxu0 0
        %976 = vmatpush1.bf16.xpose.msra.mxu0 0
        %977 = vmatprep.subr.bf16.mxu0 0
        %978 = vmatpush1.bf16.xpose.msra.mxu0 0
        %979 = vmatprep.mubr.bf16.mxu0 0
        %980 = vmatmul.mubr.bf16.gmra.mrb[0].mxu0 %v942
        %v981 = vpop.f32.mrb[0].mxu0
        %v982 = vadd.f32 0.0, %v981
        %v983 = vpop.f32.mrb[0].mxu0
        %v984 = vpop.f32.mrb[0].mxu0
        %v985 = vadd.f32 0.0, %v984
        %v986 = vpop.f32.mrb[0].mxu0
        %987 = vdwg.mxu0
        %vm988 = vcmask 130048
        %v989 = vsel %vm988, %v982, -inf
        %990 = vmax.xlane.f32.xlu0 %v989
        %v991 = vpop.xlane.xlu0 %990
        %v992 = vsel %vm988, %v985, -inf
        %993 = vmax.xlane.f32.xlu0 %v992
        %v994 = vpop.xlane.xlu0 %993
        %v995 = vsub.f32 %v982, %v991
        %v996 = vsub.f32 %v985, %v994
        %v997 = vmul.f32 %v995, 1.442695
        %v998 = vpow.pop %v997
        %v999 = vmul.f32 %v996, 1.442695
        %v1000 = vpow.pop %v999
        %v1001 = vsel %vm988, %v998, 0.0
        %1002 = vadd.xlane.f32.xlu0 %v1001
        %v1003 = vpop.xlane.xlu0 %1002
        %v1004 = vsel %vm988, %v1000, 0.0
        %1005 = vadd.xlane.f32.xlu0 %v1004
        %v1006 = vpop.xlane.xlu0 %1005
        %v1007 = vrcp.pop %v1003
        %v1008 = vrcp.pop %v1006
        %v1009 = vpack.c.bf16 %v1000, %v998
        %v1010 = vpack.c.bf16 %v935, %v932
        %v1012 = vsel %vm988, %v1009, 0
        %1014 = vmatprep.subr.bf16.mxu0 0
        %1015 = vmatpush1.bf16.msra.mxu0 %v1010
        %1016 = vmatprep.subr.bf16.mxu0 0
        %1017 = vmatpush1.bf16.msra.mxu0 0
        %1018 = vmatprep.subr.bf16.mxu0 0
        %1019 = vmatpush1.bf16.msra.mxu0 0
        %1020 = vmatprep.subr.bf16.mxu0 0
        %1021 = vmatpush1.bf16.msra.mxu0 0
        %1022 = vmatprep.subr.bf16.mxu0 0
        %1023 = vmatpush1.bf16.msra.mxu0 0
        %1024 = vmatprep.subr.bf16.mxu0 0
        %1025 = vmatpush1.bf16.msra.mxu0 0
        %1026 = vmatprep.subr.bf16.mxu0 0
        %1027 = vmatpush1.bf16.msra.mxu0 0
        %1028 = vmatprep.subr.bf16.mxu0 0
        %1029 = vmatpush1.bf16.msra.mxu0 0
        %1030 = vmatprep.subr.bf16.mxu0 0
        %1031 = vmatpush1.bf16.msra.mxu0 0
        %1032 = vmatprep.subr.bf16.mxu0 0
        %1033 = vmatpush1.bf16.msra.mxu0 0
        %1034 = vmatprep.subr.bf16.mxu0 0
        %1035 = vmatpush1.bf16.msra.mxu0 0
        %1036 = vmatprep.subr.bf16.mxu0 0
        %1037 = vmatpush1.bf16.msra.mxu0 0
        %1038 = vmatprep.subr.bf16.mxu0 0
        %1039 = vmatpush1.bf16.msra.mxu0 0
        %1040 = vmatprep.subr.bf16.mxu0 0
        %1041 = vmatpush1.bf16.msra.mxu0 0
        %1042 = vmatprep.subr.bf16.mxu0 0
        %1043 = vmatpush1.bf16.msra.mxu0 0
        %1044 = vmatprep.subr.bf16.mxu0 0
        %1045 = vmatpush1.bf16.msra.mxu0 0
        %1046 = vmatprep.mubr.bf16.mxu0 0
        %1047 = vmatmul.mubr.bf16.gmra.mrb[0].mxu0 %v1012
        %v1048 = vpop.f32.mrb[0].mxu0
        %v1049 = vadd.f32 0.0, %v1048
        %v1050 = vpop.f32.mrb[0].mxu0
        %v1051 = vpop.f32.mrb[0].mxu0
        %v1052 = vadd.f32 0.0, %v1051
        %v1053 = vpop.f32.mrb[0].mxu0
        %1054 = vdwg.mxu0
        %v1055 = vmul.f32 %v1049, %v1007
        %v1056 = vmul.f32 %v1052, %v1008
        %v1057 = vpack.c.bf16 %v1056, %v1055
        %1058 = vst.msk [vmem:[#allocation2] sm:$0xff] %vm940, %v1057
        %1060 = vrot.lane.b32.xlu0 %v938, 96
        %v1061 = vpop.permute.xlu0 %1060
        %1063 = vrot.lane.b32.xlu0 %v939, 96
        %v1064 = vpop.permute.xlu0 %1063
        %v1066 = vsel %vm940, %v1061, 0
        %v1069 = vsel %vm940, %v1064, 0
        %1071 = vmatprep.subr.bf16.mxu0 0
        %1072 = vmatpush1.bf16.xpose.msra.mxu0 %v1069
        %1073 = vmatprep.subr.bf16.mxu0 0
        %1074 = vmatpush1.bf16.xpose.msra.mxu0 0
        %1075 = vmatprep.subr.bf16.mxu0 0
        %1076 = vmatpush1.bf16.xpose.msra.mxu0 0
        %1077 = vmatprep.subr.bf16.mxu0 0
        %1078 = vmatpush1.bf16.xpose.msra.mxu0 0
        %1079 = vmatprep.subr.bf16.mxu0 0
        %1080 = vmatpush1.bf16.xpose.msra.mxu0 0
        %1081 = vmatprep.subr.bf16.mxu0 0
        %1082 = vmatpush1.bf16.xpose.msra.mxu0 0
        %1083 = vmatprep.subr.bf16.mxu0 0
        %1084 = vmatpush1.bf16.xpose.msra.mxu0 0
        %1085 = vmatprep.subr.bf16.mxu0 0
        %1086 = vmatpush1.bf16.xpose.msra.mxu0 0
        %1087 = vmatprep.subr.bf16.mxu0 0
        %1088 = vmatpush1.bf16.xpose.msra.mxu0 0
        %1089 = vmatprep.subr.bf16.mxu0 0
        %1090 = vmatpush1.bf16.xpose.msra.mxu0 0
        %1091 = vmatprep.subr.bf16.mxu0 0
        %1092 = vmatpush1.bf16.xpose.msra.mxu0 0
        %1093 = vmatprep.subr.bf16.mxu0 0
        %1094 = vmatpush1.bf16.xpose.msra.mxu0 0
        %1095 = vmatprep.subr.bf16.mxu0 0
        %1096 = vmatpush1.bf16.xpose.msra.mxu0 0
        %1097 = vmatprep.subr.bf16.mxu0 0
        %1098 = vmatpush1.bf16.xpose.msra.mxu0 0
        %1099 = vmatprep.subr.bf16.mxu0 0
        %1100 = vmatpush1.bf16.xpose.msra.mxu0 0
        %1101 = vmatprep.subr.bf16.mxu0 0
        %1102 = vmatpush1.bf16.xpose.msra.mxu0 0
        %1103 = vmatprep.mubr.bf16.mxu0 0
        %1104 = vmatmul.mubr.bf16.gmra.mrb[0].mxu0 %v1066
        %v1105 = vpop.f32.mrb[0].mxu0
        %v1106 = vadd.f32 0.0, %v1105
        %v1107 = vpop.f32.mrb[0].mxu0
        %v1108 = vpop.f32.mrb[0].mxu0
        %v1109 = vadd.f32 0.0, %v1108
        %v1110 = vpop.f32.mrb[0].mxu0
        %1111 = vdwg.mxu0
        %v1112 = vsel %vm988, %v1106, -inf
        %1113 = vmax.xlane.f32.xlu0 %v1112
        %v1114 = vpop.xlane.xlu0 %1113
        %v1115 = vsel %vm988, %v1109, -inf
        %1116 = vmax.xlane.f32.xlu0 %v1115
        %v1117 = vpop.xlane.xlu0 %1116
        %v1118 = vsub.f32 %v1106, %v1114
        %v1119 = vsub.f32 %v1109, %v1117
        %v1120 = vmul.f32 %v1118, 1.442695
        %v1121 = vpow.pop %v1120
        %v1122 = vmul.f32 %v1119, 1.442695
        %v1123 = vpow.pop %v1122
        %v1124 = vsel %vm988, %v1121, 0.0
        %1125 = vadd.xlane.f32.xlu0 %v1124
        %v1126 = vpop.xlane.xlu0 %1125
        %v1127 = vsel %vm988, %v1123, 0.0
        %1128 = vadd.xlane.f32.xlu0 %v1127
        %v1129 = vpop.xlane.xlu0 %1128
        %v1130 = vrcp.pop %v1126
        %v1131 = vrcp.pop %v1129
        %v1132 = vpack.c.bf16 %v1123, %v1121
        %1134 = vrot.lane.b32.xlu0 %v1010, 96
        %v1135 = vpop.permute.xlu0 %1134
        %v1138 = vsel %vm988, %v1132, 0
        %1140 = vmatprep.subr.bf16.mxu0 0
        %1141 = vmatpush1.bf16.msra.mxu0 %v1135
        %1142 = vmatprep.subr.bf16.mxu0 0
        %1143 = vmatpush1.bf16.msra.mxu0 0
        %1144 = vmatprep.subr.bf16.mxu0 0
        %1145 = vmatpush1.bf16.msra.mxu0 0
        %1146 = vmatprep.subr.bf16.mxu0 0
        %1147 = vmatpush1.bf16.msra.mxu0 0
        %1148 = vmatprep.subr.bf16.mxu0 0
        %1149 = vmatpush1.bf16.msra.mxu0 0
        %1150 = vmatprep.subr.bf16.mxu0 0
        %1151 = vmatpush1.bf16.msra.mxu0 0
        %1152 = vmatprep.subr.bf16.mxu0 0
        %1153 = vmatpush1.bf16.msra.mxu0 0
        %1154 = vmatprep.subr.bf16.mxu0 0
        %1155 = vmatpush1.bf16.msra.mxu0 0
        %1156 = vmatprep.subr.bf16.mxu0 0
        %1157 = vmatpush1.bf16.msra.mxu0 0
        %1158 = vmatprep.subr.bf16.mxu0 0
        %1159 = vmatpush1.bf16.msra.mxu0 0
        %1160 = vmatprep.subr.bf16.mxu0 0
        %1161 = vmatpush1.bf16.msra.mxu0 0
        %1162 = vmatprep.subr.bf16.mxu0 0
        %1163 = vmatpush1.bf16.msra.mxu0 0
        %1164 = vmatprep.subr.bf16.mxu0 0
        %1165 = vmatpush1.bf16.msra.mxu0 0
        %1166 = vmatprep.subr.bf16.mxu0 0
        %1167 = vmatpush1.bf16.msra.mxu0 0
        %1168 = vmatprep.subr.bf16.mxu0 0
        %1169 = vmatpush1.bf16.msra.mxu0 0
        %1170 = vmatprep.subr.bf16.mxu0 0
        %1171 = vmatpush1.bf16.msra.mxu0 0
        %1172 = vmatprep.mubr.bf16.mxu0 0
        %1173 = vmatmul.mubr.bf16.gmra.mrb[0].mxu0 %v1138
        %v1174 = vpop.f32.mrb[0].mxu0
        %v1175 = vadd.f32 0.0, %v1174
        %v1176 = vpop.f32.mrb[0].mxu0
        %v1177 = vpop.f32.mrb[0].mxu0
        %v1178 = vadd.f32 0.0, %v1177
        %v1179 = vpop.f32.mrb[0].mxu0
        %1180 = vdwg.mxu0
        %v1181 = vmul.f32 %v1175, %v1130
        %v1182 = vmul.f32 %v1178, %v1131
        %v1183 = vpack.c.bf16 %v1182, %v1181
        %1185 = vrot.lane.b32.xlu0 %v1183, 32
        %v1186 = vpop.permute.xlu0 %1185
        %vm1188 = vcmask 523520
        %1189 = vst.msk [vmem:[#allocation2] sm:$0xff] %vm1188, %v1186
        %1190 = vrot.lane.b32.xlu0 %v938, 64
        %v1191 = vpop.permute.xlu0 %1190
        %1192 = vrot.lane.b32.xlu0 %v939, 64
        %v1193 = vpop.permute.xlu0 %1192
        %v1195 = vsel %vm940, %v1191, 0
        %v1198 = vsel %vm940, %v1193, 0
        %1200 = vmatprep.subr.bf16.mxu0 0
        %1201 = vmatpush1.bf16.xpose.msra.mxu0 %v1198
        %1202 = vmatprep.subr.bf16.mxu0 0
        %1203 = vmatpush1.bf16.xpose.msra.mxu0 0
        %1204 = vmatprep.subr.bf16.mxu0 0
        %1205 = vmatpush1.bf16.xpose.msra.mxu0 0
        %1206 = vmatprep.subr.bf16.mxu0 0
        %1207 = vmatpush1.bf16.xpose.msra.mxu0 0
        %1208 = vmatprep.subr.bf16.mxu0 0
        %1209 = vmatpush1.bf16.xpose.msra.mxu0 0
        %1210 = vmatprep.subr.bf16.mxu0 0
        %1211 = vmatpush1.bf16.xpose.msra.mxu0 0
        %1212 = vmatprep.subr.bf16.mxu0 0
        %1213 = vmatpush1.bf16.xpose.msra.mxu0 0
        %1214 = vmatprep.subr.bf16.mxu0 0
        %1215 = vmatpush1.bf16.xpose.msra.mxu0 0
        %1216 = vmatprep.subr.bf16.mxu0 0
        %1217 = vmatpush1.bf16.xpose.msra.mxu0 0
        %1218 = vmatprep.subr.bf16.mxu0 0
        %1219 = vmatpush1.bf16.xpose.msra.mxu0 0
        %1220 = vmatprep.subr.bf16.mxu0 0
        %1221 = vmatpush1.bf16.xpose.msra.mxu0 0
        %1222 = vmatprep.subr.bf16.mxu0 0
        %1223 = vmatpush1.bf16.xpose.msra.mxu0 0
        %1224 = vmatprep.subr.bf16.mxu0 0
        %1225 = vmatpush1.bf16.xpose.msra.mxu0 0
        %1226 = vmatprep.subr.bf16.mxu0 0
        %1227 = vmatpush1.bf16.xpose.msra.mxu0 0
        %1228 = vmatprep.subr.bf16.mxu0 0
        %1229 = vmatpush1.bf16.xpose.msra.mxu0 0
        %1230 = vmatprep.subr.bf16.mxu0 0
        %1231 = vmatpush1.bf16.xpose.msra.mxu0 0
        %1232 = vmatprep.mubr.bf16.mxu0 0
        %1233 = vmatmul.mubr.bf16.gmra.mrb[0].mxu0 %v1195
        %v1234 = vpop.f32.mrb[0].mxu0
        %v1235 = vadd.f32 0.0, %v1234
        %v1236 = vpop.f32.mrb[0].mxu0
        %v1237 = vpop.f32.mrb[0].mxu0
        %v1238 = vadd.f32 0.0, %v1237
        %v1239 = vpop.f32.mrb[0].mxu0
        %1240 = vdwg.mxu0
        %v1241 = vsel %vm988, %v1235, -inf
        %1242 = vmax.xlane.f32.xlu0 %v1241
        %v1243 = vpop.xlane.xlu0 %1242
        %v1244 = vsel %vm988, %v1238, -inf
        %1245 = vmax.xlane.f32.xlu0 %v1244
        %v1246 = vpop.xlane.xlu0 %1245
        %v1247 = vsub.f32 %v1235, %v1243
        %v1248 = vsub.f32 %v1238, %v1246
        %v1249 = vmul.f32 %v1247, 1.442695
        %v1250 = vpow.pop %v1249
        %v1251 = vmul.f32 %v1248, 1.442695
        %v1252 = vpow.pop %v1251
        %v1253 = vsel %vm988, %v1250, 0.0
        %1254 = vadd.xlane.f32.xlu0 %v1253
        %v1255 = vpop.xlane.xlu0 %1254
        %v1256 = vsel %vm988, %v1252, 0.0
        %1257 = vadd.xlane.f32.xlu0 %v1256
        %v1258 = vpop.xlane.xlu0 %1257
        %v1259 = vrcp.pop %v1255
        %v1260 = vrcp.pop %v1258
        %v1261 = vpack.c.bf16 %v1252, %v1250
        %1262 = vrot.lane.b32.xlu0 %v1010, 64
        %v1263 = vpop.permute.xlu0 %1262
        %v1266 = vsel %vm988, %v1261, 0
        %1268 = vmatprep.subr.bf16.mxu0 0
        %1269 = vmatpush1.bf16.msra.mxu0 %v1263
        %1270 = vmatprep.subr.bf16.mxu0 0
        %1271 = vmatpush1.bf16.msra.mxu0 0
        %1272 = vmatprep.subr.bf16.mxu0 0
        %1273 = vmatpush1.bf16.msra.mxu0 0
        %1274 = vmatprep.subr.bf16.mxu0 0
        %1275 = vmatpush1.bf16.msra.mxu0 0
        %1276 = vmatprep.subr.bf16.mxu0 0
        %1277 = vmatpush1.bf16.msra.mxu0 0
        %1278 = vmatprep.subr.bf16.mxu0 0
        %1279 = vmatpush1.bf16.msra.mxu0 0
        %1280 = vmatprep.subr.bf16.mxu0 0
        %1281 = vmatpush1.bf16.msra.mxu0 0
        %1282 = vmatprep.subr.bf16.mxu0 0
        %1283 = vmatpush1.bf16.msra.mxu0 0
        %1284 = vmatprep.subr.bf16.mxu0 0
        %1285 = vmatpush1.bf16.msra.mxu0 0
        %1286 = vmatprep.subr.bf16.mxu0 0
        %1287 = vmatpush1.bf16.msra.mxu0 0
        %1288 = vmatprep.subr.bf16.mxu0 0
        %1289 = vmatpush1.bf16.msra.mxu0 0
        %1290 = vmatprep.subr.bf16.mxu0 0
        %1291 = vmatpush1.bf16.msra.mxu0 0
        %1292 = vmatprep.subr.bf16.mxu0 0
        %1293 = vmatpush1.bf16.msra.mxu0 0
        %1294 = vmatprep.subr.bf16.mxu0 0
        %1295 = vmatpush1.bf16.msra.mxu0 0
        %1296 = vmatprep.subr.bf16.mxu0 0
        %1297 = vmatpush1.bf16.msra.mxu0 0
        %1298 = vmatprep.subr.bf16.mxu0 0
        %1299 = vmatpush1.bf16.msra.mxu0 0
        %1300 = vmatprep.mubr.bf16.mxu0 0
        %1301 = vmatmul.mubr.bf16.gmra.mrb[0].mxu0 %v1266
        %v1302 = vpop.f32.mrb[0].mxu0
        %v1303 = vadd.f32 0.0, %v1302
        %v1304 = vpop.f32.mrb[0].mxu0
        %v1305 = vpop.f32.mrb[0].mxu0
        %v1306 = vadd.f32 0.0, %v1305
        %v1307 = vpop.f32.mrb[0].mxu0
        %1308 = vdwg.mxu0
        %v1309 = vmul.f32 %v1303, %v1259
        %v1310 = vmul.f32 %v1306, %v1260
        %v1311 = vpack.c.bf16 %v1310, %v1309
        %1313 = vrot.lane.b32.xlu0 %v1311, 64
        %v1314 = vpop.permute.xlu0 %1313
        %vm1316 = vcmask 785920
        %1317 = vst.msk [vmem:[#allocation2] sm:$0xff] %vm1316, %v1314
        %1318 = vrot.lane.b32.xlu0 %v938, 32
        %v1319 = vpop.permute.xlu0 %1318
        %1320 = vrot.lane.b32.xlu0 %v939, 32
        %v1321 = vpop.permute.xlu0 %1320
        %v1323 = vsel %vm940, %v1319, 0
        %v1326 = vsel %vm940, %v1321, 0
        %1328 = vmatprep.subr.bf16.mxu0 0
        %1329 = vmatpush1.bf16.xpose.msra.mxu0 %v1326
        %1330 = vmatprep.subr.bf16.mxu0 0
        %1331 = vmatpush1.bf16.xpose.msra.mxu0 0
        %1332 = vmatprep.subr.bf16.mxu0 0
        %1333 = vmatpush1.bf16.xpose.msra.mxu0 0
        %1334 = vmatprep.subr.bf16.mxu0 0
        %1335 = vmatpush1.bf16.xpose.msra.mxu0 0
        %1336 = vmatprep.subr.bf16.mxu0 0
        %1337 = vmatpush1.bf16.xpose.msra.mxu0 0
        %1338 = vmatprep.subr.bf16.mxu0 0
        %1339 = vmatpush1.bf16.xpose.msra.mxu0 0
        %1340 = vmatprep.subr.bf16.mxu0 0
        %1341 = vmatpush1.bf16.xpose.msra.mxu0 0
        %1342 = vmatprep.subr.bf16.mxu0 0
        %1343 = vmatpush1.bf16.xpose.msra.mxu0 0
        %1344 = vmatprep.subr.bf16.mxu0 0
        %1345 = vmatpush1.bf16.xpose.msra.mxu0 0
        %1346 = vmatprep.subr.bf16.mxu0 0
        %1347 = vmatpush1.bf16.xpose.msra.mxu0 0
        %1348 = vmatprep.subr.bf16.mxu0 0
        %1349 = vmatpush1.bf16.xpose.msra.mxu0 0
        %1350 = vmatprep.subr.bf16.mxu0 0
        %1351 = vmatpush1.bf16.xpose.msra.mxu0 0
        %1352 = vmatprep.subr.bf16.mxu0 0
        %1353 = vmatpush1.bf16.xpose.msra.mxu0 0
        %1354 = vmatprep.subr.bf16.mxu0 0
        %1355 = vmatpush1.bf16.xpose.msra.mxu0 0
        %1356 = vmatprep.subr.bf16.mxu0 0
        %1357 = vmatpush1.bf16.xpose.msra.mxu0 0
        %1358 = vmatprep.subr.bf16.mxu0 0
        %1359 = vmatpush1.bf16.xpose.msra.mxu0 0
        %1360 = vmatprep.mubr.bf16.mxu0 0
        %1361 = vmatmul.mubr.bf16.gmra.mrb[0].mxu0 %v1323
        %v1362 = vpop.f32.mrb[0].mxu0
        %v1363 = vadd.f32 0.0, %v1362
        %v1364 = vpop.f32.mrb[0].mxu0
        %v1365 = vpop.f32.mrb[0].mxu0
        %v1366 = vadd.f32 0.0, %v1365
        %v1367 = vpop.f32.mrb[0].mxu0
        %1368 = vdwg.mxu0
        %v1369 = vsel %vm988, %v1363, -inf
        %1370 = vmax.xlane.f32.xlu0 %v1369
        %v1371 = vpop.xlane.xlu0 %1370
        %v1372 = vsel %vm988, %v1366, -inf
        %1373 = vmax.xlane.f32.xlu0 %v1372
        %v1374 = vpop.xlane.xlu0 %1373
        %v1375 = vsub.f32 %v1363, %v1371
        %v1376 = vsub.f32 %v1366, %v1374
        %v1377 = vmul.f32 %v1375, 1.442695
        %v1378 = vpow.pop %v1377
        %v1379 = vmul.f32 %v1376, 1.442695
        %v1380 = vpow.pop %v1379
        %v1381 = vsel %vm988, %v1378, 0.0
        %1382 = vadd.xlane.f32.xlu0 %v1381
        %v1383 = vpop.xlane.xlu0 %1382
        %v1384 = vsel %vm988, %v1380, 0.0
        %1385 = vadd.xlane.f32.xlu0 %v1384
        %v1386 = vpop.xlane.xlu0 %1385
        %v1387 = vrcp.pop %v1383
        %v1388 = vrcp.pop %v1386
        %v1389 = vpack.c.bf16 %v1380, %v1378
        %1390 = vrot.lane.b32.xlu0 %v1010, 32
        %v1391 = vpop.permute.xlu0 %1390
        %v1394 = vsel %vm988, %v1389, 0
        %1396 = vmatprep.subr.bf16.mxu0 0
        %1397 = vmatpush1.bf16.msra.mxu0 %v1391
        %1398 = vmatprep.subr.bf16.mxu0 0
        %1399 = vmatpush1.bf16.msra.mxu0 0
        %1400 = vmatprep.subr.bf16.mxu0 0
        %1401 = vmatpush1.bf16.msra.mxu0 0
        %1402 = vmatprep.subr.bf16.mxu0 0
        %1403 = vmatpush1.bf16.msra.mxu0 0
        %1404 = vmatprep.subr.bf16.mxu0 0
        %1405 = vmatpush1.bf16.msra.mxu0 0
        %1406 = vmatprep.subr.bf16.mxu0 0
        %1407 = vmatpush1.bf16.msra.mxu0 0
        %1408 = vmatprep.subr.bf16.mxu0 0
        %1409 = vmatpush1.bf16.msra.mxu0 0
        %1410 = vmatprep.subr.bf16.mxu0 0
        %1411 = vmatpush1.bf16.msra.mxu0 0
        %1412 = vmatprep.subr.bf16.mxu0 0
        %1413 = vmatpush1.bf16.msra.mxu0 0
        %1414 = vmatprep.subr.bf16.mxu0 0
        %1415 = vmatpush1.bf16.msra.mxu0 0
        %1416 = vmatprep.subr.bf16.mxu0 0
        %1417 = vmatpush1.bf16.msra.mxu0 0
        %1418 = vmatprep.subr.bf16.mxu0 0
        %1419 = vmatpush1.bf16.msra.mxu0 0
        %1420 = vmatprep.subr.bf16.mxu0 0
        %1421 = vmatpush1.bf16.msra.mxu0 0
        %1422 = vmatprep.subr.bf16.mxu0 0
        %1423 = vmatpush1.bf16.msra.mxu0 0
        %1424 = vmatprep.subr.bf16.mxu0 0
        %1425 = vmatpush1.bf16.msra.mxu0 0
        %1426 = vmatprep.subr.bf16.mxu0 0
        %1427 = vmatpush1.bf16.msra.mxu0 0
        %1428 = vmatprep.mubr.bf16.mxu0 0
        %1429 = vmatmul.mubr.bf16.gmra.mrb[0].mxu0 %v1394
        %v1430 = vpop.f32.mrb[0].mxu0
        %v1431 = vadd.f32 0.0, %v1430
        %v1432 = vpop.f32.mrb[0].mxu0
        %v1433 = vpop.f32.mrb[0].mxu0
        %v1434 = vadd.f32 0.0, %v1433
        %v1435 = vpop.f32.mrb[0].mxu0
        %1436 = vdwg.mxu0
        %v1437 = vmul.f32 %v1431, %v1387
        %v1438 = vmul.f32 %v1434, %v1388
        %v1439 = vpack.c.bf16 %v1438, %v1437
        %1441 = vrot.lane.b32.xlu0 %v1439, 96
        %v1442 = vpop.permute.xlu0 %1441
        %vm1444 = vcmask 1048320
        %1445 = vst.msk [vmem:[#allocation2] sm:$0xff] %vm1444, %v1442
        %v1446 = vld [vmem:[#allocation2] sm:$0xff]
        %v1447 = vld [vmem:[#allocation12] sm:$0xf]
        %v1448 = vld [vmem:[#allocation12 + $0x4] sm:$0xf]
        %v1449 = vld [vmem:[#allocation12 + $0x8] sm:$0xf]
        %v1450 = vld [vmem:[#allocation12 + $0xc] sm:$0xf]
        %v1451 = vld [vmem:[#allocation12 + $0x10] sm:$0xf]
        %v1452 = vld [vmem:[#allocation12 + $0x14] sm:$0xf]
        %v1453 = vld [vmem:[#allocation12 + $0x18] sm:$0xf]
        %v1454 = vld [vmem:[#allocation12 + $0x1c] sm:$0xf]
        %v1455 = vld [vmem:[#allocation12 + $0x20] sm:$0xf]
        %v1456 = vld [vmem:[#allocation12 + $0x24] sm:$0xf]
        %v1457 = vld [vmem:[#allocation12 + $0x28] sm:$0xf]
        %v1458 = vld [vmem:[#allocation12 + $0x2c] sm:$0xf]
        %v1459 = vld [vmem:[#allocation12 + $0x30] sm:$0xf]
        %v1460 = vld [vmem:[#allocation12 + $0x34] sm:$0xf]
        %v1461 = vld [vmem:[#allocation12 + $0x38] sm:$0xf]
        %v1462 = vld [vmem:[#allocation12 + $0x3c] sm:$0xf]
        %v1463 = vld [vmem:[#allocation14] sm:$0x1]
        %v1465 = vlaneseq
        %v1466 = vshrl.u32 %v1465, 7
        %v1467 = vsub.s32 0, %v1466
        %v1468 = vrot.slane %v1463, %v1467
        %v1486 = vunpack.c.l.b16 %v1447
        %v1487 = vunpack.c.l.b16 %v1448
        %v1488 = vunpack.c.l.b16 %v1449
        %v1489 = vunpack.c.l.b16 %v1450
        %v1490 = vunpack.c.l.b16 %v1451
        %v1491 = vunpack.c.l.b16 %v1452
        %v1492 = vunpack.c.l.b16 %v1453
        %v1493 = vunpack.c.l.b16 %v1454
        %v1494 = vunpack.c.l.b16 %v1455
        %v1495 = vunpack.c.l.b16 %v1456
        %v1496 = vunpack.c.l.b16 %v1457
        %v1497 = vunpack.c.l.b16 %v1458
        %v1498 = vunpack.c.l.b16 %v1459
        %v1499 = vunpack.c.l.b16 %v1460
        %v1500 = vunpack.c.l.b16 %v1461
        %v1501 = vunpack.c.l.b16 %v1462
        %v1502 = vpack.c.b16 %v1487, %v1486
        %v1503 = vpack.c.b16 %v1489, %v1488
        %v1504 = vpack.c.b16 %v1491, %v1490
        %v1505 = vpack.c.b16 %v1493, %v1492
        %v1506 = vpack.c.b16 %v1495, %v1494
        %v1507 = vpack.c.b16 %v1497, %v1496
        %v1508 = vpack.c.b16 %v1499, %v1498
        %v1509 = vpack.c.b16 %v1501, %v1500
        %1518 = vmatprep.subr.bf16.mxu0 0
        %1519 = vmatpush1.bf16.msra.mxu0 %v1502
        %1520 = vmatprep.subr.bf16.mxu0 0
        %1521 = vmatpush1.bf16.msra.mxu0 %v1503
        %1522 = vmatprep.subr.bf16.mxu0 0
        %1523 = vmatpush1.bf16.msra.mxu0 %v1504
        %1524 = vmatprep.subr.bf16.mxu0 0
        %1525 = vmatpush1.bf16.msra.mxu0 %v1505
        %1526 = vmatprep.subr.bf16.mxu0 0
        %1527 = vmatpush1.bf16.msra.mxu0 %v1506
        %1528 = vmatprep.subr.bf16.mxu0 0
        %1529 = vmatpush1.bf16.msra.mxu0 %v1507
        %1530 = vmatprep.subr.bf16.mxu0 0
        %1531 = vmatpush1.bf16.msra.mxu0 %v1508
        %1532 = vmatprep.subr.bf16.mxu0 0
        %1533 = vmatpush1.bf16.msra.mxu0 %v1509
        %1534 = vmatprep.subr.bf16.mxu0 0
        %1535 = vmatpush1.bf16.msra.mxu0 0
        %1536 = vmatprep.subr.bf16.mxu0 0
        %1537 = vmatpush1.bf16.msra.mxu0 0
        %1538 = vmatprep.subr.bf16.mxu0 0
        %1539 = vmatpush1.bf16.msra.mxu0 0
        %1540 = vmatprep.subr.bf16.mxu0 0
        %1541 = vmatpush1.bf16.msra.mxu0 0
        %1542 = vmatprep.subr.bf16.mxu0 0
        %1543 = vmatpush1.bf16.msra.mxu0 0
        %1544 = vmatprep.subr.bf16.mxu0 0
        %1545 = vmatpush1.bf16.msra.mxu0 0
        %1546 = vmatprep.subr.bf16.mxu0 0
        %1547 = vmatpush1.bf16.msra.mxu0 0
        %1548 = vmatprep.subr.bf16.mxu0 0
        %1549 = vmatpush1.bf16.msra.mxu0 0
        %1550 = vmatprep.mubr.bf16.mxu0 0
        %1551 = vmatmul.mubr.bf16.gmra.mrb[0].mxu0 %v1446
        %v1552 = vpop.f32.mrb[0].mxu0
        %v1553 = vadd.f32 %v1468, %v1552
        %v1554 = vpop.f32.mrb[0].mxu0
        %v1555 = vpop.f32.mrb[0].mxu0
        %v1556 = vadd.f32 %v1468, %v1555
        %v1557 = vpop.f32.mrb[0].mxu0
        %1558 = vdwg.mxu0
        %v1559 = vadd.f32 %v618, %v1553
        %v1560 = vadd.f32 %v619, %v1556
        %v1561 = vld [vmem:[#allocation15] sm:$0x1]
        %v1562 = vld [vmem:[#allocation17] sm:$0x1]
        %1563 = vadd.xlane.f32.xlu0 %v1559
        %v1564 = vpop.xlane.xlu0 %1563
        %1565 = vadd.xlane.f32.xlu0 %v1560
        %v1566 = vpop.xlane.xlu0 %1565
        %v1567 = vmul.f32 %v1564, %v626
        %v1568 = vmul.f32 %v1566, %v626
        %v1569 = vsub.f32 %v1559, %v1567
        %v1570 = vsub.f32 %v1560, %v1568
        %v1571 = vmul.f32 %v1569, %v1569
        %v1572 = vmul.f32 %v1570, %v1570
        %1573 = vadd.xlane.f32.xlu0 %v1571
        %v1574 = vpop.xlane.xlu0 %1573
        %1575 = vadd.xlane.f32.xlu0 %v1572
        %v1576 = vpop.xlane.xlu0 %1575
        %v1577 = vmul.f32 %v1574, %v637
        %v1578 = vmul.f32 %v1576, %v637
        %v1579 = vrsqrt.pop %v1577
        %v1580 = vmul.f32 %v1577, %v1579
        %vm1581 = vcmp.eq.f32.partialorder %v1577, inf
        %v1582 = vsel %vm1581, %v1577, %v1580
        %vm1583 = vcmp.eq.f32.partialorder %v1577, 0.0
        %v1584 = vand.u32 %v1577, 2147483648
        %v1585 = vsel %vm1583, %v1584, %v1582
        %v1586 = vrsqrt.pop %v1578
        %v1587 = vmul.f32 %v1578, %v1586
        %vm1588 = vcmp.eq.f32.partialorder %v1578, inf
        %v1589 = vsel %vm1588, %v1578, %v1587
        %vm1590 = vcmp.eq.f32.partialorder %v1578, 0.0
        %v1591 = vand.u32 %v1578, 2147483648
        %v1592 = vsel %vm1590, %v1591, %v1589
        %v1593 = vadd.f32 %v1585, 1e-06
        %v1594 = vadd.f32 %v1592, 1e-06
        %v1595 = vrcp.pop %v1593
        %v1596 = vrcp.pop %v1594
        %v1597 = vmul.f32 %v1569, %v1595
        %v1598 = vmul.f32 %v1570, %v1596
        %v1600 = vlaneseq
        %v1601 = vshrl.u32 %v1600, 7
        %v1602 = vsub.s32 0, %v1601
        %v1603 = vrot.slane %v1561, %v1602
        %v1605 = vmul.f32 %v1597, %v1603
        %v1606 = vmul.f32 %v1598, %v1603
        %v1608 = vlaneseq
        %v1609 = vshrl.u32 %v1608, 7
        %v1610 = vsub.s32 0, %v1609
        %v1611 = vrot.slane %v1562, %v1610
        %v1613 = vadd.f32 %v1605, %v1611
        %v1614 = vadd.f32 %v1606, %v1611
        %v1615 = vpack.c.bf16 %v1614, %v1613
        %v1616 = vld [vmem:[#allocation18] sm:$0xff]
        %v1617 = vld [vmem:[#allocation18 + $0x8] sm:$0xff]
        %v1618 = vld [vmem:[#allocation18 + $0x10] sm:$0xff]
        %v1619 = vld [vmem:[#allocation18 + $0x18] sm:$0xff]
        %v1620 = vld [vmem:[#allocation18 + $0x20] sm:$0xff]
        %v1621 = vld [vmem:[#allocation18 + $0x28] sm:$0xff]
        %v1622 = vld [vmem:[#allocation18 + $0x30] sm:$0xff]
        %v1623 = vld [vmem:[#allocation18 + $0x38] sm:$0xff]
        %v1624 = vld [vmem:[#allocation18 + $0x40] sm:$0xff]
        %v1625 = vld [vmem:[#allocation18 + $0x48] sm:$0xff]
        %v1626 = vld [vmem:[#allocation18 + $0x50] sm:$0xff]
        %v1627 = vld [vmem:[#allocation18 + $0x58] sm:$0xff]
        %v1628 = vld [vmem:[#allocation18 + $0x60] sm:$0xff]
        %v1629 = vld [vmem:[#allocation18 + $0x68] sm:$0xff]
        %v1630 = vld [vmem:[#allocation18 + $0x70] sm:$0xff]
        %v1631 = vld [vmem:[#allocation18 + $0x78] sm:$0xff]
        %v1632 = vld [vmem:[#allocation20] sm:$0x3]
        %v1634 = vlaneseq
        %v1635 = vshrl.u32 %v1634, 7
        %v1636 = vsub.s32 0, %v1635
        %v1637 = vrot.slane %v1632, %v1636
        %v1638 = vlaneseq
        %v1639 = vshrl.u32 %v1638, 7
        %v1640 = vsub.s32 1, %v1639
        %v1641 = vrot.slane %v1632, %v1640
        %v1660 = vunpack.c.l.b16 %v1616
        %v1661 = vunpack.c.h.b16 %v1616
        %v1662 = vunpack.c.l.b16 %v1617
        %v1663 = vunpack.c.h.b16 %v1617
        %v1664 = vunpack.c.l.b16 %v1618
        %v1665 = vunpack.c.h.b16 %v1618
        %v1666 = vunpack.c.l.b16 %v1619
        %v1667 = vunpack.c.h.b16 %v1619
        %v1668 = vunpack.c.l.b16 %v1620
        %v1669 = vunpack.c.h.b16 %v1620
        %v1670 = vunpack.c.l.b16 %v1621
        %v1671 = vunpack.c.h.b16 %v1621
        %v1672 = vunpack.c.l.b16 %v1622
        %v1673 = vunpack.c.h.b16 %v1622
        %v1674 = vunpack.c.l.b16 %v1623
        %v1675 = vunpack.c.h.b16 %v1623
        %v1676 = vunpack.c.l.b16 %v1624
        %v1677 = vunpack.c.h.b16 %v1624
        %v1678 = vunpack.c.l.b16 %v1625
        %v1679 = vunpack.c.h.b16 %v1625
        %v1680 = vunpack.c.l.b16 %v1626
        %v1681 = vunpack.c.h.b16 %v1626
        %v1682 = vunpack.c.l.b16 %v1627
        %v1683 = vunpack.c.h.b16 %v1627
        %v1684 = vunpack.c.l.b16 %v1628
        %v1685 = vunpack.c.h.b16 %v1628
        %v1686 = vunpack.c.l.b16 %v1629
        %v1687 = vunpack.c.h.b16 %v1629
        %v1688 = vunpack.c.l.b16 %v1630
        %v1689 = vunpack.c.h.b16 %v1630
        %v1690 = vunpack.c.l.b16 %v1631
        %v1691 = vunpack.c.h.b16 %v1631
        %v1692 = vpack.c.b16 %v1662, %v1660
        %v1693 = vpack.c.b16 %v1663, %v1661
        %v1694 = vpack.c.b16 %v1666, %v1664
        %v1695 = vpack.c.b16 %v1667, %v1665
        %v1696 = vpack.c.b16 %v1670, %v1668
        %v1697 = vpack.c.b16 %v1671, %v1669
        %v1698 = vpack.c.b16 %v1674, %v1672
        %v1699 = vpack.c.b16 %v1675, %v1673
        %v1700 = vpack.c.b16 %v1678, %v1676
        %v1701 = vpack.c.b16 %v1679, %v1677
        %v1702 = vpack.c.b16 %v1682, %v1680
        %v1703 = vpack.c.b16 %v1683, %v1681
        %v1704 = vpack.c.b16 %v1686, %v1684
        %v1705 = vpack.c.b16 %v1687, %v1685
        %v1706 = vpack.c.b16 %v1690, %v1688
        %v1707 = vpack.c.b16 %v1691, %v1689
        %1724 = vmatprep.subr.bf16.mxu0 %v1693
        %1725 = vmatpush1.bf16.msra.mxu0 %v1692
        %1726 = vmatprep.subr.bf16.mxu0 %v1695
        %1727 = vmatpush1.bf16.msra.mxu0 %v1694
        %1728 = vmatprep.subr.bf16.mxu0 %v1697
        %1729 = vmatpush1.bf16.msra.mxu0 %v1696
        %1730 = vmatprep.subr.bf16.mxu0 %v1699
        %1731 = vmatpush1.bf16.msra.mxu0 %v1698
        %1732 = vmatprep.subr.bf16.mxu0 %v1701
        %1733 = vmatpush1.bf16.msra.mxu0 %v1700
        %1734 = vmatprep.subr.bf16.mxu0 %v1703
        %1735 = vmatpush1.bf16.msra.mxu0 %v1702
        %1736 = vmatprep.subr.bf16.mxu0 %v1705
        %1737 = vmatpush1.bf16.msra.mxu0 %v1704
        %1738 = vmatprep.subr.bf16.mxu0 %v1707
        %1739 = vmatpush1.bf16.msra.mxu0 %v1706
        %1740 = vmatprep.subr.bf16.mxu0 0
        %1741 = vmatpush1.bf16.msra.mxu0 0
        %1742 = vmatprep.subr.bf16.mxu0 0
        %1743 = vmatpush1.bf16.msra.mxu0 0
        %1744 = vmatprep.subr.bf16.mxu0 0
        %1745 = vmatpush1.bf16.msra.mxu0 0
        %1746 = vmatprep.subr.bf16.mxu0 0
        %1747 = vmatpush1.bf16.msra.mxu0 0
        %1748 = vmatprep.subr.bf16.mxu0 0
        %1749 = vmatpush1.bf16.msra.mxu0 0
        %1750 = vmatprep.subr.bf16.mxu0 0
        %1751 = vmatpush1.bf16.msra.mxu0 0
        %1752 = vmatprep.subr.bf16.mxu0 0
        %1753 = vmatpush1.bf16.msra.mxu0 0
        %1754 = vmatprep.subr.bf16.mxu0 0
        %1755 = vmatpush1.bf16.msra.mxu0 0
        %1756 = vmatprep.mubr.bf16.mxu0 0
        %1757 = vmatmul.mubr.bf16.gmra.mrb[0].mxu0 %v1615
        %v1758 = vpop.f32.mrb[0].mxu0
        %v1759 = vadd.f32 %v1637, %v1758
        %v1760 = vpop.f32.mrb[0].mxu0
        %v1761 = vadd.f32 %v1641, %v1760
        %v1762 = vpop.f32.mrb[0].mxu0
        %v1763 = vadd.f32 %v1637, %v1762
        %v1764 = vpop.f32.mrb[0].mxu0
        %v1765 = vadd.f32 %v1641, %v1764
        %1766 = vdwg.mxu0
        %v1767 = vmax.f32 %v1759, 0.0
        %v1768 = vmax.f32 %v1761, 0.0
        %v1769 = vmax.f32 %v1763, 0.0
        %v1770 = vmax.f32 %v1765, 0.0
        %v1771 = vpack.c.bf16 %v1769, %v1767
        %v1772 = vpack.c.bf16 %v1770, %v1768
        %v1773 = vld [vmem:[#allocation21] sm:$0xf]
        %v1774 = vld [vmem:[#allocation21 + $0x4] sm:$0xf]
        %v1775 = vld [vmem:[#allocation21 + $0x8] sm:$0xf]
        %v1776 = vld [vmem:[#allocation21 + $0xc] sm:$0xf]
        %v1777 = vld [vmem:[#allocation21 + $0x10] sm:$0xf]
        %v1778 = vld [vmem:[#allocation21 + $0x14] sm:$0xf]
        %v1779 = vld [vmem:[#allocation21 + $0x18] sm:$0xf]
        %v1780 = vld [vmem:[#allocation21 + $0x1c] sm:$0xf]
        %v1781 = vld [vmem:[#allocation21 + $0x20] sm:$0xf]
        %v1782 = vld [vmem:[#allocation21 + $0x24] sm:$0xf]
        %v1783 = vld [vmem:[#allocation21 + $0x28] sm:$0xf]
        %v1784 = vld [vmem:[#allocation21 + $0x2c] sm:$0xf]
        %v1785 = vld [vmem:[#allocation21 + $0x30] sm:$0xf]
        %v1786 = vld [vmem:[#allocation21 + $0x34] sm:$0xf]
        %v1787 = vld [vmem:[#allocation21 + $0x38] sm:$0xf]
        %v1788 = vld [vmem:[#allocation21 + $0x3c] sm:$0xf]
        %v1789 = vld [vmem:[#allocation21 + $0x40] sm:$0xf]
        %v1790 = vld [vmem:[#allocation21 + $0x44] sm:$0xf]
        %v1791 = vld [vmem:[#allocation21 + $0x48] sm:$0xf]
        %v1792 = vld [vmem:[#allocation21 + $0x4c] sm:$0xf]
        %v1793 = vld [vmem:[#allocation21 + $0x50] sm:$0xf]
        %v1794 = vld [vmem:[#allocation21 + $0x54] sm:$0xf]
        %v1795 = vld [vmem:[#allocation21 + $0x58] sm:$0xf]
        %v1796 = vld [vmem:[#allocation21 + $0x5c] sm:$0xf]
        %v1797 = vld [vmem:[#allocation21 + $0x60] sm:$0xf]
        %v1798 = vld [vmem:[#allocation21 + $0x64] sm:$0xf]
        %v1799 = vld [vmem:[#allocation21 + $0x68] sm:$0xf]
        %v1800 = vld [vmem:[#allocation21 + $0x6c] sm:$0xf]
        %v1801 = vld [vmem:[#allocation21 + $0x70] sm:$0xf]
        %v1802 = vld [vmem:[#allocation21 + $0x74] sm:$0xf]
        %v1803 = vld [vmem:[#allocation21 + $0x78] sm:$0xf]
        %v1804 = vld [vmem:[#allocation21 + $0x7c] sm:$0xf]
        %v1805 = vld [vmem:[#allocation23] sm:$0x1]
        %v1807 = vlaneseq
        %v1808 = vshrl.u32 %v1807, 7
        %v1809 = vsub.s32 0, %v1808
        %v1810 = vrot.slane %v1805, %v1809
        %v1844 = vunpack.c.l.b16 %v1773
        %v1845 = vunpack.c.l.b16 %v1774
        %v1846 = vunpack.c.l.b16 %v1775
        %v1847 = vunpack.c.l.b16 %v1776
        %v1848 = vunpack.c.l.b16 %v1777
        %v1849 = vunpack.c.l.b16 %v1778
        %v1850 = vunpack.c.l.b16 %v1779
        %v1851 = vunpack.c.l.b16 %v1780
        %v1852 = vunpack.c.l.b16 %v1781
        %v1853 = vunpack.c.l.b16 %v1782
        %v1854 = vunpack.c.l.b16 %v1783
        %v1855 = vunpack.c.l.b16 %v1784
        %v1856 = vunpack.c.l.b16 %v1785
        %v1857 = vunpack.c.l.b16 %v1786
        %v1858 = vunpack.c.l.b16 %v1787
        %v1859 = vunpack.c.l.b16 %v1788
        %v1860 = vunpack.c.l.b16 %v1789
        %v1861 = vunpack.c.l.b16 %v1790
        %v1862 = vunpack.c.l.b16 %v1791
        %v1863 = vunpack.c.l.b16 %v1792
        %v1864 = vunpack.c.l.b16 %v1793
        %v1865 = vunpack.c.l.b16 %v1794
        %v1866 = vunpack.c.l.b16 %v1795
        %v1867 = vunpack.c.l.b16 %v1796
        %v1868 = vunpack.c.l.b16 %v1797
        %v1869 = vunpack.c.l.b16 %v1798
        %v1870 = vunpack.c.l.b16 %v1799
        %v1871 = vunpack.c.l.b16 %v1800
        %v1872 = vunpack.c.l.b16 %v1801
        %v1873 = vunpack.c.l.b16 %v1802
        %v1874 = vunpack.c.l.b16 %v1803
        %v1875 = vunpack.c.l.b16 %v1804
        %v1876 = vpack.c.b16 %v1845, %v1844
        %v1877 = vpack.c.b16 %v1847, %v1846
        %v1878 = vpack.c.b16 %v1849, %v1848
        %v1879 = vpack.c.b16 %v1851, %v1850
        %v1880 = vpack.c.b16 %v1853, %v1852
        %v1881 = vpack.c.b16 %v1855, %v1854
        %v1882 = vpack.c.b16 %v1857, %v1856
        %v1883 = vpack.c.b16 %v1859, %v1858
        %v1884 = vpack.c.b16 %v1861, %v1860
        %v1885 = vpack.c.b16 %v1863, %v1862
        %v1886 = vpack.c.b16 %v1865, %v1864
        %v1887 = vpack.c.b16 %v1867, %v1866
        %v1888 = vpack.c.b16 %v1869, %v1868
        %v1889 = vpack.c.b16 %v1871, %v1870
        %v1890 = vpack.c.b16 %v1873, %v1872
        %v1891 = vpack.c.b16 %v1875, %v1874
        %1908 = vmatprep.subr.bf16.mxu0 0
        %1909 = vmatpush1.bf16.msra.mxu0 %v1876
        %1910 = vmatprep.subr.bf16.mxu0 0
        %1911 = vmatpush1.bf16.msra.mxu0 %v1877
        %1912 = vmatprep.subr.bf16.mxu0 0
        %1913 = vmatpush1.bf16.msra.mxu0 %v1878
        %1914 = vmatprep.subr.bf16.mxu0 0
        %1915 = vmatpush1.bf16.msra.mxu0 %v1879
        %1916 = vmatprep.subr.bf16.mxu0 0
        %1917 = vmatpush1.bf16.msra.mxu0 %v1880
        %1918 = vmatprep.subr.bf16.mxu0 0
        %1919 = vmatpush1.bf16.msra.mxu0 %v1881
        %1920 = vmatprep.subr.bf16.mxu0 0
        %1921 = vmatpush1.bf16.msra.mxu0 %v1882
        %1922 = vmatprep.subr.bf16.mxu0 0
        %1923 = vmatpush1.bf16.msra.mxu0 %v1883
        %1924 = vmatprep.subr.bf16.mxu0 0
        %1925 = vmatpush1.bf16.msra.mxu0 %v1884
        %1926 = vmatprep.subr.bf16.mxu0 0
        %1927 = vmatpush1.bf16.msra.mxu0 %v1885
        %1928 = vmatprep.subr.bf16.mxu0 0
        %1929 = vmatpush1.bf16.msra.mxu0 %v1886
        %1930 = vmatprep.subr.bf16.mxu0 0
        %1931 = vmatpush1.bf16.msra.mxu0 %v1887
        %1932 = vmatprep.subr.bf16.mxu0 0
        %1933 = vmatpush1.bf16.msra.mxu0 %v1888
        %1934 = vmatprep.subr.bf16.mxu0 0
        %1935 = vmatpush1.bf16.msra.mxu0 %v1889
        %1936 = vmatprep.subr.bf16.mxu0 0
        %1937 = vmatpush1.bf16.msra.mxu0 %v1890
        %1938 = vmatprep.subr.bf16.mxu0 0
        %1939 = vmatpush1.bf16.msra.mxu0 %v1891
        %1940 = vmatprep.mubr.bf16.mxu0 %v1772
        %1941 = vmatmul.mubr.bf16.gmra.mrb[0].mxu0 %v1771
        %v1942 = vpop.f32.mrb[0].mxu0
        %v1943 = vadd.f32 %v1810, %v1942
        %v1944 = vpop.f32.mrb[0].mxu0
        %v1945 = vpop.f32.mrb[0].mxu0
        %v1946 = vadd.f32 %v1810, %v1945
        %v1947 = vpop.f32.mrb[0].mxu0
        %1948 = vdwg.mxu0
        %v1949 = vadd.f32 %v1559, %v1943
        %v1950 = vadd.f32 %v1560, %v1946
        %1951 = vst [vmem:[%s616] sm:$0xff] %v1949
        %1952 = vst [vmem:[%s616 + $0x8] sm:$0xff] %v1950
        %s1953 = sand.u32 %s322, 1
        %s1954 = scalar_lea.sflag [#allocation5], %s1953
        %s1955 = sand.u32 %s322, 1
        %s1956 = smul.addr %s1955, 16
        %s1957 = scalar_lea.vmem [#allocation24], %s1956
        // Predicated region
        $region125: #{tpu_custom_call.1} parent=71 // pred_check
          %p1958 = pneg %p332
        $region126: #{tpu_custom_call.1} parent=71 // pred_check_branch
          %1960 = sbr.rel (%p1958) target = $region128
        $region127: #{tpu_custom_call.1} parent=71 // pred_region
          %s1962 = ssub.s32 256, 256
          %1963 = vsyncadd %s1954, %s1962
          %s1964 = smul.addr %s36, 2
          %s1965 = smul.addr %s1964, 128
          %s1966 = scalar_lea.hbm %s13, %s1965
          %s1967 = sshll.u32 %s1957, 4
          %s1968 = int_to_ptr.vmem [resolvable:$true] %s1967
          %1973 = dma.vmem_to_hbm [thread:$0]  %s1968, 256, %s1966, %s1954, 128, 128, 8
        $region128: #{tpu_custom_call.1} parent=71 // pred_fallthru
          _
      $region72: #{tpu_custom_call.1} parent=5 // pred_fallthru
        _
      %p1974 = scmp.le.s32.totalorder 2, %s31
      // Predicated region
      $region129: #{tpu_custom_call.1} parent=5 // pred_check
        %p1975 = pneg %p1974
      $region130: #{tpu_custom_call.1} parent=5 // pred_check_branch
        %1977 = sbr.rel (%p1975) target = $region132
      $region131: #{tpu_custom_call.1} parent=5 // pred_region
        %s1978 = ssub.s32 %s31, 2
        // Predicated region
        $region133: #{tpu_custom_call.1} parent=131 // pred_check
          %p1979 = pneg %p338
        $region134: #{tpu_custom_call.1} parent=131 // pred_check_branch
          %1981 = sbr.rel (%p1979) target = $region136
        $region135: #{tpu_custom_call.1} parent=131 // pred_region
          %s1982 = sand.u32 %s323, 1
          %s1983 = scalar_lea.sflag [#allocation5], %s1982
          %s1984 = sand.u32 %s323, 1
          %s1985 = smul.addr %s1984, 16
          %s1986 = scalar_lea.vmem [#allocation24], %s1985
          %1987 = dma.done %s1983, 256
        $region136: #{tpu_custom_call.1} parent=131 // pred_fallthru
          _
      $region132: #{tpu_custom_call.1} parent=5 // pred_fallthru
        _
    $region6: #{tpu_custom_call.1} parent=1 // loop_footer
      %s35 = sadd.s32 1, %s31
    $region7: #{tpu_custom_call.1} parent=1 // loop_footer_branch
      %30 = sbr.rel target = $region3
    $region8: #{tpu_custom_call.1} parent=1 // loop_exit
      _
    %1988 = vsyncpa [#allocation4], 1
    %s1989 = scalar_lea.sflag [#allocation4], 1
    %1990 = vsyncpa %s1989, 1
    %1991 = vsyncpa [#allocation7], 1
    %1992 = vsyncpa [#allocation10], 1
    %1993 = vsyncpa [#allocation13], 1
    %1994 = vsyncpa [#allocation16], 1
    %1995 = vsyncpa [#allocation19], 1
    %1996 = vsyncpa [#allocation22], 1
    %1997 = vsyncpa [#allocation5], 1
    %s1998 = scalar_lea.sflag [#allocation5], 1
    %1999 = vsyncpa %s1998, 1

</llo_original>
